<compile_context>
chip_gen: v5e
topology: v5e:2x2
jax: 0.10.0
libtpu: 0.0.40
codegen_flags: <defaults>
</compile_context>

<pallas_src>
import jax
import jax.numpy as jnp
import numpy as np
from jax import lax
from jax.experimental import pallas as pl
from jax.experimental.pallas import tpu as pltpu


# ----------------------------------------------------------------------------
# Tile picker: largest multiple of 128 that divides m (capped), else full m.
# ----------------------------------------------------------------------------
def _pick_tile(m, cap=4096):
    if m % 128 != 0 or m <= 128:
        return m
    t = min(cap, m)
    t -= t % 128
    while m % t != 0:
        t -= 128
    return t


# ----------------------------------------------------------------------------
# Kernel 1: frequency-domain fusion (amp_fuse chain, pha_fuse chain, cos/sin).
# Slabs are (C, pixels): pixels on the 128-lane axis, matmuls are W @ X.
# ----------------------------------------------------------------------------
def _freq_fuse_kernel(mag_ref, pha_ref,
                      w1a_ref, b1a_ref, w2a_ref, b2a_ref,
                      w1p_ref, b1p_ref, w2p_ref, b2p_ref,
                      real_ref, imag_ref):
    mag = mag_ref[...]                                   # (C, tm)
    pha = pha_ref[...]
    # amp_fuse: conv1x1 -> LeakyReLU(0.1) -> conv1x1
    h = jnp.dot(w1a_ref[...], mag, preferred_element_type=jnp.float32) + b1a_ref[...]
    h = jnp.where(h >= 0, h, 0.1 * h)
    mag_f = jnp.dot(w2a_ref[...], h, preferred_element_type=jnp.float32) + b2a_ref[...]
    # pha_fuse: conv1x1 -> LeakyReLU(0.1) -> conv1x1
    g = jnp.dot(w1p_ref[...], pha, preferred_element_type=jnp.float32) + b1p_ref[...]
    g = jnp.where(g >= 0, g, 0.1 * g)
    pha_f = jnp.dot(w2p_ref[...], g, preferred_element_type=jnp.float32) + b2p_ref[...]
    # real/imag of Mag*exp(i*Pha); repeat_interleave commutes and is applied
    # outside on the (H, W) grid before the ifft.
    real_ref[...] = mag_f * jnp.cos(pha_f)
    imag_ref[...] = mag_f * jnp.sin(pha_f)


def freq_fuse(mag, pha, p, cap=4096):
    n, c, m = mag.shape
    tm = _pick_tile(m, cap)
    row_spec = pl.BlockSpec((None, c, tm), lambda b, i: (b, 0, i))

    def full(a):
        return pl.BlockSpec(a.shape, lambda b, i: (0,) * a.ndim)

    ws = [p[k] for k in ("amp_w1", "amp_b1", "amp_w2", "amp_b2",
                         "pha_w1", "pha_b1", "pha_w2", "pha_b2")]
    return pl.pallas_call(
        _freq_fuse_kernel,
        out_shape=(jax.ShapeDtypeStruct((n, c, m), jnp.float32),
                   jax.ShapeDtypeStruct((n, c, m), jnp.float32)),
        grid_spec=pltpu.PrefetchScalarGridSpec(
            num_scalar_prefetch=0,
            grid=(n, m // tm),
            in_specs=[row_spec, row_spec] + [full(a) for a in ws],
            out_specs=(row_spec, row_spec)),
        compiler_params=pltpu.CompilerParams(
            dimension_semantics=("parallel", "parallel")),
    )(mag, pha, *ws)


# ----------------------------------------------------------------------------
# Kernel 2: fused [ConvTranspose2d(4,s=2,p=1) -> fuse_a] + [post -> fuse_b] + b
# All affine ops are folded at weight-prep time; the kernel is two dots + bias.
#   out[(ph*2+pw)*Cout + co, pix] for the four output phases (oh%2, ow%2).
# ----------------------------------------------------------------------------
def _fuse_out_kernel(patch_ref, crop_ref, wup_ref, wpost_ref, bf_ref, out_ref):
    out_ref[...] = (
        jnp.dot(wup_ref[...], patch_ref[...], preferred_element_type=jnp.float32)
        + jnp.dot(wpost_ref[...], crop_ref[...], preferred_element_type=jnp.float32)
        + bf_ref[...])


def fuse_out(patches, crop, p, cap=4096):
    n, k9, m = patches.shape
    cin = crop.shape[1]
    c4 = p["bias"].shape[0]                              # 4 * cout
    tm = _pick_tile(m, cap)
    patch_spec = pl.BlockSpec((None, k9, tm), lambda b, i: (b, 0, i))
    crop_spec = pl.BlockSpec((None, cin, tm), lambda b, i: (b, 0, i))
    out_spec = pl.BlockSpec((None, c4, tm), lambda b, i: (b, 0, i))

    def full(a):
        return pl.BlockSpec(a.shape, lambda b, i: (0,) * a.ndim)

    ws = [p["up_w"], p["post_w"], p["bias"]]
    return pl.pallas_call(
        _fuse_out_kernel,
        out_shape=jax.ShapeDtypeStruct((n, c4, m), jnp.float32),
        grid_spec=pltpu.PrefetchScalarGridSpec(
            num_scalar_prefetch=0,
            grid=(n, m // tm),
            in_specs=[patch_spec, crop_spec] + [full(a) for a in ws],
            out_specs=out_spec),
        compiler_params=pltpu.CompilerParams(
            dimension_semantics=("parallel", "parallel")),
    )(patches, crop, *ws)


# ----------------------------------------------------------------------------
# Parameters (deterministic synthetic init; shapes follow the PyTorch module)
# ----------------------------------------------------------------------------
def init_params_torch_layout(key, cin, cout):
    ks = jax.random.split(key, 14)
    w = lambda k, shape, s: (s * jax.random.normal(k, shape)).astype(jnp.float32)
    sc, sb = 0.35, 0.05
    return {
        "amp_w1": w(ks[0], (cin, cin, 1, 1), sc), "amp_b1": w(ks[1], (cin,), sb),
        "amp_w2": w(ks[2], (cin, cin, 1, 1), sc), "amp_b2": w(ks[3], (cin,), sb),
        "pha_w1": w(ks[4], (cin, cin, 1, 1), sc), "pha_b1": w(ks[5], (cin,), sb),
        "pha_w2": w(ks[6], (cin, cin, 1, 1), sc), "pha_b2": w(ks[7], (cin,), sb),
        "post_w": w(ks[8], (cout, cin, 1, 1), sc), "post_b": w(ks[9], (cout,), sb),
        "up_w": w(ks[10], (cin, cout, 4, 4), sc), "up_b": w(ks[11], (cout,), sb),
        "fuse_w": w(ks[12], (cout, 2 * cout, 1, 1), sc), "fuse_b": w(ks[13], (cout,), sb),
    }


def to_kernel_params(tp, cin, cout):
    c1 = lambda a: a[:, :, 0, 0]                         # Conv2d 1x1 -> (Co, Ci)
    col = lambda b: b[:, None]                           # bias -> (Co, 1)

    w_fa = tp["fuse_w"][:, :cout, 0, 0]                  # acts on x2 (up branch)
    w_fb = tp["fuse_w"][:, cout:, 0, 0]                  # acts on x3 (crop branch)

    # 4-phase decomposition of ConvTranspose2d(cin, cout, 4, stride=2, pad=1):
    # output (2i+ph, 2j+pw) = sum over 2x2 taps of x in a 3x3 neighbourhood.
    # Patch columns are ordered ((dh*3+dw)*cin + ci), dh/dw in {0,1,2} being
    # the offset into the 1-padded input; kh = 3 + ph - 2*dh (and same for w).
    up = tp["up_w"]                                      # (cin, cout, 4, 4)
    wp = jnp.zeros((2, 2, cout, 3, 3, cin), jnp.float32)
    for ph in range(2):
        for pw in range(2):
            for th in range(2):
                for tw in range(2):
                    wp = wp.at[ph, pw, :, ph + th, pw + tw, :].set(
                        up[:, :, 3 - ph - 2 * th, 3 - pw - 2 * tw].T)
    # Fold fuse_a into the transposed-conv weights.
    wp = jnp.einsum('oc,pqcdei->pqodei', w_fa, wp)
    w_up_folded = wp.reshape(4 * cout, 9 * cin)

    # Fold fuse_b into post; replicate per phase (crop value is phase-invariant
    # because post(rep2(crop)) == rep2(post(crop)) for a 1x1 conv).
    w_post_folded = jnp.tile(w_fb @ c1(tp["post_w"]), (4, 1))        # (4*cout, cin)

    b_folded = w_fa @ tp["up_b"] + w_fb @ tp["post_b"] + tp["fuse_b"]
    b_folded = jnp.tile(b_folded[:, None], (4, 1))                   # (4*cout, 1)

    return {
        "amp_w1": c1(tp["amp_w1"]), "amp_b1": col(tp["amp_b1"]),
        "amp_w2": c1(tp["amp_w2"]), "amp_b2": col(tp["amp_b2"]),
        "pha_w1": c1(tp["pha_w1"]), "pha_b1": col(tp["pha_b1"]),
        "pha_w2": c1(tp["pha_w2"]), "pha_b2": col(tp["pha_b2"]),
        "up_w": w_up_folded, "post_w": w_post_folded, "bias": b_folded,
    }


# ----------------------------------------------------------------------------
# Forward pass (Pallas kernels + FFT / reshape glue, all in NCHW-native slabs)
# ----------------------------------------------------------------------------
def frescat_area_forward(x, p):
    n, cin, h, w = x.shape
    cout = p["bias"].shape[0] // 4
    hw = h * w

    # ---- frequency branch ----
    fx = jnp.fft.fft2(x)                                 # (N, C, H, W) complex
    mag = jnp.abs(fx).reshape(n, cin, hw)
    pha = jnp.angle(fx).reshape(n, cin, hw)
    real, imag = freq_fuse(mag, pha, p)                  # (N, C, H*W) each
    comp = lax.complex(real, imag).reshape(n, cin, h, w)
    # repeat_interleave(2, H) then (2, W) as a single broadcast+reshape copy
    comp = jnp.broadcast_to(comp[:, :, :, None, :, None],
                            (n, cin, h, 2, w, 2)).reshape(n, cin, 2 * h, 2 * w)
    output = jnp.abs(jnp.fft.ifft2(comp))                # (N, C, 2H, 2W)

    # quadrant crop back to (H, W); the nearest-2x upsample is NOT materialized
    # (it is absorbed into the per-phase fused kernel below).
    h2, w2 = h // 2, w // 2
    rows = jnp.concatenate([output[:, :, :h2, :], output[:, :, 3 * h2:, :]], axis=2)
    crop = jnp.concatenate([rows[:, :, :, :w2], rows[:, :, :, 3 * w2:]], axis=3)
    crop = crop.reshape(n, cin, hw)

    # ---- 9-tap patch slab for the 4-phase transposed conv ----
    xp = jnp.pad(x, ((0, 0), (0, 0), (1, 1), (1, 1)))
    patches = jnp.stack([xp[:, :, dh:dh + h, dw:dw + w]
                         for dh in range(3) for dw in range(3)], axis=1)
    patches = patches.reshape(n, 9 * cin, hw)            # (N, 9*Cin, H*W)

    out4 = fuse_out(patches, crop, p)                    # (N, 4*Cout, H*W)
    out6 = out4.reshape(n, 2, 2, cout, h, w)             # (N, ph, pw, Co, H, W)
    return out6.transpose(0, 3, 4, 1, 5, 2).reshape(n, cout, 2 * h, 2 * w)


# ----------------------------------------------------------------------------
# Pure-JAX reference (NCHW, PyTorch-layout weights) for a correctness check
# ----------------------------------------------------------------------------
def reference_forward(x, tp):
    n, c, h, w = x.shape

    def conv1x1(a, ww, bb):
        return jnp.einsum('nchw,oc->nohw', a, ww[:, :, 0, 0]) + bb[None, :, None, None]

    x2 = lax.conv_general_dilated(
        x, tp["up_w"][:, :, ::-1, ::-1], window_strides=(1, 1),
        padding=[(2, 2), (2, 2)], lhs_dilation=(2, 2), rhs_dilation=(1, 1),
        dimension_numbers=('NCHW', 'IOHW', 'NCHW'))
    x2 = x2 + tp["up_b"][None, :, None, None]

    fx = jnp.fft.fft2(x)
    mag, pha = jnp.abs(fx), jnp.angle(fx)

    def chain(a, w1, b1, w2, b2):
        h1 = conv1x1(a, w1, b1)
        h1 = jnp.where(h1 >= 0, h1, 0.1 * h1)
        return conv1x1(h1, w2, b2)

    Mag = chain(mag, tp["amp_w1"], tp["amp_b1"], tp["amp_w2"], tp["amp_b2"])
    Pha = chain(pha, tp["pha_w1"], tp["pha_b1"], tp["pha_w2"], tp["pha_b2"])
    rep2 = lambda a: jnp.repeat(jnp.repeat(a, 2, axis=2), 2, axis=3)
    amp_f, pha_f = rep2(Mag), rep2(Pha)
    out_c = amp_f * jnp.cos(pha_f) + 1j * (amp_f * jnp.sin(pha_f))
    output = jnp.abs(jnp.fft.ifft2(out_c))

    h2, w2_ = h // 2, w // 2
    crop = jnp.zeros_like(x)
    crop = crop.at[:, :, :h2, :w2_].set(output[:, :, :h2, :w2_])
    crop = crop.at[:, :, h2:, :w2_].set(output[:, :, 3 * h2:, :w2_])
    crop = crop.at[:, :, :h2, w2_:].set(output[:, :, :h2, 3 * w2_:])
    crop = crop.at[:, :, h2:, w2_:].set(output[:, :, 3 * h2:, 3 * w2_:])
    crop = rep2(crop)
    x3 = conv1x1(crop, tp["post_w"], tp["post_b"])
    return conv1x1(jnp.concatenate([x2, x3], axis=1), tp["fuse_w"], tp["fuse_b"])


# ----------------------------------------------------------------------------
if __name__ == "__main__":
    key = jax.random.PRNGKey(0)
    kx, kp = jax.random.split(key)
    N, Cin, Cout, H, W = 2, 8, 8, 16, 16

    x = jax.random.normal(kx, (N, Cin, H, W), dtype=jnp.float32)
    tp = init_params_torch_layout(kp, Cin, Cout)
    p = to_kernel_params(tp, Cin, Cout)

    fwd = jax.jit(frescat_area_forward)
    out = jax.block_until_ready(fwd(x, p))

    ref = jax.block_until_ready(reference_forward(x, tp))

    assert out.shape == (N, Cout, 2 * H, 2 * W)
    np.testing.assert_allclose(np.asarray(out), np.asarray(ref), rtol=2e-2, atol=2e-2)
    print("KERNEL_OK")
</pallas_src>

<mosaic_0001>
module attributes {stable_mosaic.version = 11 : i64} {
  func.func @_freq_fuse_kernel(%arg0: i32, %arg1: i32, %arg2: memref<1x8x256xf32, #tpu.memory_space<vmem>>, %arg3: memref<1x8x256xf32, #tpu.memory_space<vmem>>, %arg4: memref<8x8xf32, #tpu.memory_space<vmem>>, %arg5: memref<8x1xf32, #tpu.memory_space<vmem>>, %arg6: memref<8x8xf32, #tpu.memory_space<vmem>>, %arg7: memref<8x1xf32, #tpu.memory_space<vmem>>, %arg8: memref<8x8xf32, #tpu.memory_space<vmem>>, %arg9: memref<8x1xf32, #tpu.memory_space<vmem>>, %arg10: memref<8x8xf32, #tpu.memory_space<vmem>>, %arg11: memref<8x1xf32, #tpu.memory_space<vmem>>, %arg12: memref<1x8x256xf32, #tpu.memory_space<vmem>>, %arg13: memref<1x8x256xf32, #tpu.memory_space<vmem>>) attributes {dimension_semantics = [#tpu.dimension_semantics<parallel>, #tpu.dimension_semantics<parallel>], iteration_bounds = array<i64: 2, 1>, scalar_prefetch = 0 : i64, scratch_operands = 0 : i64, tpu.core_type = #tpu.core_type<tc>, window_params = [{transform_indices = @transform_0, window_bounds = array<i64: 1, 8, 256>}, {transform_indices = @transform_1, window_bounds = array<i64: 1, 8, 256>}, {pipeline_mode = #tpu.pipeline_mode<synchronous>, transform_indices = @transform_2, window_bounds = array<i64: 8, 8>}, {pipeline_mode = #tpu.pipeline_mode<synchronous>, transform_indices = @transform_3, window_bounds = array<i64: 8, 1>}, {pipeline_mode = #tpu.pipeline_mode<synchronous>, transform_indices = @transform_4, window_bounds = array<i64: 8, 8>}, {pipeline_mode = #tpu.pipeline_mode<synchronous>, transform_indices = @transform_5, window_bounds = array<i64: 8, 1>}, {pipeline_mode = #tpu.pipeline_mode<synchronous>, transform_indices = @transform_6, window_bounds = array<i64: 8, 8>}, {pipeline_mode = #tpu.pipeline_mode<synchronous>, transform_indices = @transform_7, window_bounds = array<i64: 8, 1>}, {pipeline_mode = #tpu.pipeline_mode<synchronous>, transform_indices = @transform_8, window_bounds = array<i64: 8, 8>}, {pipeline_mode = #tpu.pipeline_mode<synchronous>, transform_indices = @transform_9, window_bounds = array<i64: 8, 1>}, {transform_indices = @transform_10, window_bounds = array<i64: 1, 8, 256>}, {transform_indices = @transform_11, window_bounds = array<i64: 1, 8, 256>}]} {
    %c0 = arith.constant 0 : index
    %c0_0 = arith.constant 0 : index
    %c0_1 = arith.constant 0 : index
    %0 = vector.load %arg2[%c0, %c0_0, %c0_1] : memref<1x8x256xf32, #tpu.memory_space<vmem>>, vector<1x8x256xf32>
    %1 = vector.shape_cast %0 : vector<1x8x256xf32> to vector<8x256xf32>
    %c0_2 = arith.constant 0 : index
    %c0_3 = arith.constant 0 : index
    %c0_4 = arith.constant 0 : index
    %2 = vector.load %arg3[%c0_2, %c0_3, %c0_4] : memref<1x8x256xf32, #tpu.memory_space<vmem>>, vector<1x8x256xf32>
    %3 = vector.shape_cast %2 : vector<1x8x256xf32> to vector<8x256xf32>
    %c0_5 = arith.constant 0 : index
    %c0_6 = arith.constant 0 : index
    %4 = vector.load %arg4[%c0_5, %c0_6] : memref<8x8xf32, #tpu.memory_space<vmem>>, vector<8x8xf32>
    %cst = arith.constant dense<0.000000e+00> : vector<8x256xf32>
    %5 = tpu.matmul %4, %1, %cst {dimension_numbers = #tpu.dot_dimension_numbers<[1], [0], [0], [1], [0, 0, 1, 1], [], []>} : vector<8x8xf32>, vector<8x256xf32>, vector<8x256xf32> -> vector<8x256xf32>
    %c0_7 = arith.constant 0 : index
    %c0_8 = arith.constant 0 : index
    %6 = vector.load %arg5[%c0_7, %c0_8] : memref<8x1xf32, #tpu.memory_space<vmem>>, vector<8x1xf32>
    %7 = vector.broadcast %6 : vector<8x1xf32> to vector<8x256xf32>
    %8 = arith.addf %5, %7 : vector<8x256xf32>
    %cst_9 = arith.constant 0.000000e+00 : f32
    %9 = vector.broadcast %cst_9 : f32 to vector<8x256xf32>
    %10 = arith.cmpf oge, %8, %9 : vector<8x256xf32>
    %cst_10 = arith.constant 1.000000e-01 : f32
    %11 = vector.broadcast %cst_10 : f32 to vector<8x256xf32>
    %12 = arith.mulf %11, %8 : vector<8x256xf32>
    %13 = arith.select %10, %8, %12 : vector<8x256xi1>, vector<8x256xf32>
    %c0_11 = arith.constant 0 : index
    %c0_12 = arith.constant 0 : index
    %14 = vector.load %arg6[%c0_11, %c0_12] : memref<8x8xf32, #tpu.memory_space<vmem>>, vector<8x8xf32>
    %cst_13 = arith.constant dense<0.000000e+00> : vector<8x256xf32>
    %15 = tpu.matmul %14, %13, %cst_13 {dimension_numbers = #tpu.dot_dimension_numbers<[1], [0], [0], [1], [0, 0, 1, 1], [], []>} : vector<8x8xf32>, vector<8x256xf32>, vector<8x256xf32> -> vector<8x256xf32>
    %c0_14 = arith.constant 0 : index
    %c0_15 = arith.constant 0 : index
    %16 = vector.load %arg7[%c0_14, %c0_15] : memref<8x1xf32, #tpu.memory_space<vmem>>, vector<8x1xf32>
    %17 = vector.broadcast %16 : vector<8x1xf32> to vector<8x256xf32>
    %18 = arith.addf %15, %17 : vector<8x256xf32>
    %c0_16 = arith.constant 0 : index
    %c0_17 = arith.constant 0 : index
    %19 = vector.load %arg8[%c0_16, %c0_17] : memref<8x8xf32, #tpu.memory_space<vmem>>, vector<8x8xf32>
    %cst_18 = arith.constant dense<0.000000e+00> : vector<8x256xf32>
    %20 = tpu.matmul %19, %3, %cst_18 {dimension_numbers = #tpu.dot_dimension_numbers<[1], [0], [0], [1], [0, 0, 1, 1], [], []>} : vector<8x8xf32>, vector<8x256xf32>, vector<8x256xf32> -> vector<8x256xf32>
    %c0_19 = arith.constant 0 : index
    %c0_20 = arith.constant 0 : index
    %21 = vector.load %arg9[%c0_19, %c0_20] : memref<8x1xf32, #tpu.memory_space<vmem>>, vector<8x1xf32>
    %22 = vector.broadcast %21 : vector<8x1xf32> to vector<8x256xf32>
    %23 = arith.addf %20, %22 : vector<8x256xf32>
    %cst_21 = arith.constant 0.000000e+00 : f32
    %24 = vector.broadcast %cst_21 : f32 to vector<8x256xf32>
    %25 = arith.cmpf oge, %23, %24 : vector<8x256xf32>
    %cst_22 = arith.constant 1.000000e-01 : f32
    %26 = vector.broadcast %cst_22 : f32 to vector<8x256xf32>
    %27 = arith.mulf %26, %23 : vector<8x256xf32>
    %28 = arith.select %25, %23, %27 : vector<8x256xi1>, vector<8x256xf32>
    %c0_23 = arith.constant 0 : index
    %c0_24 = arith.constant 0 : index
    %29 = vector.load %arg10[%c0_23, %c0_24] : memref<8x8xf32, #tpu.memory_space<vmem>>, vector<8x8xf32>
    %cst_25 = arith.constant dense<0.000000e+00> : vector<8x256xf32>
    %30 = tpu.matmul %29, %28, %cst_25 {dimension_numbers = #tpu.dot_dimension_numbers<[1], [0], [0], [1], [0, 0, 1, 1], [], []>} : vector<8x8xf32>, vector<8x256xf32>, vector<8x256xf32> -> vector<8x256xf32>
    %c0_26 = arith.constant 0 : index
    %c0_27 = arith.constant 0 : index
    %31 = vector.load %arg11[%c0_26, %c0_27] : memref<8x1xf32, #tpu.memory_space<vmem>>, vector<8x1xf32>
    %32 = vector.broadcast %31 : vector<8x1xf32> to vector<8x256xf32>
    %33 = arith.addf %30, %32 : vector<8x256xf32>
    %34 = math.cos %33 : vector<8x256xf32>
    %35 = arith.mulf %18, %34 : vector<8x256xf32>
    %c0_28 = arith.constant 0 : index
    %c0_29 = arith.constant 0 : index
    %c0_30 = arith.constant 0 : index
    %36 = vector.load %arg12[%c0_28, %c0_29, %c0_30] : memref<1x8x256xf32, #tpu.memory_space<vmem>>, vector<1x8x256xf32>
    %37 = vector.shape_cast %36 : vector<1x8x256xf32> to vector<8x256xf32>
    %38 = vector.shape_cast %35 : vector<8x256xf32> to vector<1x8x256xf32>
    tpu.vector_store %arg12[%c0_28, %c0_29, %c0_30], %38 {strides = array<i32>} : memref<1x8x256xf32, #tpu.memory_space<vmem>>, vector<1x8x256xf32>,
    %39 = math.sin %33 : vector<8x256xf32>
    %40 = arith.mulf %18, %39 : vector<8x256xf32>
    %c0_31 = arith.constant 0 : index
    %c0_32 = arith.constant 0 : index
    %c0_33 = arith.constant 0 : index
    %41 = vector.load %arg13[%c0_31, %c0_32, %c0_33] : memref<1x8x256xf32, #tpu.memory_space<vmem>>, vector<1x8x256xf32>
    %42 = vector.shape_cast %41 : vector<1x8x256xf32> to vector<8x256xf32>
    %43 = vector.shape_cast %40 : vector<8x256xf32> to vector<1x8x256xf32>
    tpu.vector_store %arg13[%c0_31, %c0_32, %c0_33], %43 {strides = array<i32>} : memref<1x8x256xf32, #tpu.memory_space<vmem>>, vector<1x8x256xf32>,
    return
  }
  func.func @transform_0(%arg0: i32, %arg1: i32) -> (i32, i32, i32) {
    %c0_i32 = arith.constant 0 : i32
    %c0_i32_0 = arith.constant 0 : i32
    return %arg0, %c0_i32, %arg1 : i32, i32, i32
  }
  func.func @transform_1(%arg0: i32, %arg1: i32) -> (i32, i32, i32) {
    %c0_i32 = arith.constant 0 : i32
    %c0_i32_0 = arith.constant 0 : i32
    return %arg0, %c0_i32, %arg1 : i32, i32, i32
  }
  func.func @transform_2(%arg0: i32, %arg1: i32) -> (i32, i32) {
    %c0_i32 = arith.constant 0 : i32
    %c0_i32_0 = arith.constant 0 : i32
    %c0_i32_1 = arith.constant 0 : i32
    return %c0_i32, %c0_i32_0 : i32, i32
  }
  func.func @transform_3(%arg0: i32, %arg1: i32) -> (i32, i32) {
    %c0_i32 = arith.constant 0 : i32
    %c0_i32_0 = arith.constant 0 : i32
    %c0_i32_1 = arith.constant 0 : i32
    return %c0_i32, %c0_i32_0 : i32, i32
  }
  func.func @transform_4(%arg0: i32, %arg1: i32) -> (i32, i32) {
    %c0_i32 = arith.constant 0 : i32
    %c0_i32_0 = arith.constant 0 : i32
    %c0_i32_1 = arith.constant 0 : i32
    return %c0_i32, %c0_i32_0 : i32, i32
  }
  func.func @transform_5(%arg0: i32, %arg1: i32) -> (i32, i32) {
    %c0_i32 = arith.constant 0 : i32
    %c0_i32_0 = arith.constant 0 : i32
    %c0_i32_1 = arith.constant 0 : i32
    return %c0_i32, %c0_i32_0 : i32, i32
  }
  func.func @transform_6(%arg0: i32, %arg1: i32) -> (i32, i32) {
    %c0_i32 = arith.constant 0 : i32
    %c0_i32_0 = arith.constant 0 : i32
    %c0_i32_1 = arith.constant 0 : i32
    return %c0_i32, %c0_i32_0 : i32, i32
  }
  func.func @transform_7(%arg0: i32, %arg1: i32) -> (i32, i32) {
    %c0_i32 = arith.constant 0 : i32
    %c0_i32_0 = arith.constant 0 : i32
    %c0_i32_1 = arith.constant 0 : i32
    return %c0_i32, %c0_i32_0 : i32, i32
  }
  func.func @transform_8(%arg0: i32, %arg1: i32) -> (i32, i32) {
    %c0_i32 = arith.constant 0 : i32
    %c0_i32_0 = arith.constant 0 : i32
    %c0_i32_1 = arith.constant 0 : i32
    return %c0_i32, %c0_i32_0 : i32, i32
  }
  func.func @transform_9(%arg0: i32, %arg1: i32) -> (i32, i32) {
    %c0_i32 = arith.constant 0 : i32
    %c0_i32_0 = arith.constant 0 : i32
    %c0_i32_1 = arith.constant 0 : i32
    return %c0_i32, %c0_i32_0 : i32, i32
  }
  func.func @transform_10(%arg0: i32, %arg1: i32) -> (i32, i32, i32) {
    %c0_i32 = arith.constant 0 : i32
    %c0_i32_0 = arith.constant 0 : i32
    return %arg0, %c0_i32, %arg1 : i32, i32, i32
  }
  func.func @transform_11(%arg0: i32, %arg1: i32) -> (i32, i32, i32) {
    %c0_i32 = arith.constant 0 : i32
    %c0_i32_0 = arith.constant 0 : i32
    return %arg0, %c0_i32, %arg1 : i32, i32, i32
  }
}

module attributes {stable_mosaic.version = 11 : i64} {
  func.func @_fuse_out_kernel(%arg0: i32, %arg1: i32, %arg2: memref<1x72x256xf32, #tpu.memory_space<vmem>>, %arg3: memref<1x8x256xf32, #tpu.memory_space<vmem>>, %arg4: memref<32x72xf32, #tpu.memory_space<vmem>>, %arg5: memref<32x8xf32, #tpu.memory_space<vmem>>, %arg6: memref<32x1xf32, #tpu.memory_space<vmem>>, %arg7: memref<1x32x256xf32, #tpu.memory_space<vmem>>) attributes {dimension_semantics = [#tpu.dimension_semantics<parallel>, #tpu.dimension_semantics<parallel>], iteration_bounds = array<i64: 2, 1>, scalar_prefetch = 0 : i64, scratch_operands = 0 : i64, tpu.core_type = #tpu.core_type<tc>, window_params = [{transform_indices = @transform_0, window_bounds = array<i64: 1, 72, 256>}, {transform_indices = @transform_1, window_bounds = array<i64: 1, 8, 256>}, {pipeline_mode = #tpu.pipeline_mode<synchronous>, transform_indices = @transform_2, window_bounds = array<i64: 32, 72>}, {pipeline_mode = #tpu.pipeline_mode<synchronous>, transform_indices = @transform_3, window_bounds = array<i64: 32, 8>}, {pipeline_mode = #tpu.pipeline_mode<synchronous>, transform_indices = @transform_4, window_bounds = array<i64: 32, 1>}, {transform_indices = @transform_5, window_bounds = array<i64: 1, 32, 256>}]} {
    %c0 = arith.constant 0 : index
    %c0_0 = arith.constant 0 : index
    %0 = vector.load %arg4[%c0, %c0_0] : memref<32x72xf32, #tpu.memory_space<vmem>>, vector<32x72xf32>
    %c0_1 = arith.constant 0 : index
    %c0_2 = arith.constant 0 : index
    %c0_3 = arith.constant 0 : index
    %1 = vector.load %arg2[%c0_1, %c0_2, %c0_3] : memref<1x72x256xf32, #tpu.memory_space<vmem>>, vector<1x72x256xf32>
    %2 = vector.shape_cast %1 : vector<1x72x256xf32> to vector<72x256xf32>
    %cst = arith.constant dense<0.000000e+00> : vector<32x256xf32>
    %3 = tpu.matmul %0, %2, %cst {dimension_numbers = #tpu.dot_dimension_numbers<[1], [0], [0], [1], [0, 0, 1, 1], [], []>} : vector<32x72xf32>, vector<72x256xf32>, vector<32x256xf32> -> vector<32x256xf32>
    %c0_4 = arith.constant 0 : index
    %c0_5 = arith.constant 0 : index
    %4 = vector.load %arg5[%c0_4, %c0_5] : memref<32x8xf32, #tpu.memory_space<vmem>>, vector<32x8xf32>
    %c0_6 = arith.constant 0 : index
    %c0_7 = arith.constant 0 : index
    %c0_8 = arith.constant 0 : index
    %5 = vector.load %arg3[%c0_6, %c0_7, %c0_8] : memref<1x8x256xf32, #tpu.memory_space<vmem>>, vector<1x8x256xf32>
    %6 = vector.shape_cast %5 : vector<1x8x256xf32> to vector<8x256xf32>
    %cst_9 = arith.constant dense<0.000000e+00> : vector<32x256xf32>
    %7 = tpu.matmul %4, %6, %cst_9 {dimension_numbers = #tpu.dot_dimension_numbers<[1], [0], [0], [1], [0, 0, 1, 1], [], []>} : vector<32x8xf32>, vector<8x256xf32>, vector<32x256xf32> -> vector<32x256xf32>
    %8 = arith.addf %3, %7 : vector<32x256xf32>
    %c0_10 = arith.constant 0 : index
    %c0_11 = arith.constant 0 : index
    %9 = vector.load %arg6[%c0_10, %c0_11] : memref<32x1xf32, #tpu.memory_space<vmem>>, vector<32x1xf32>
    %10 = vector.broadcast %9 : vector<32x1xf32> to vector<32x256xf32>
    %11 = arith.addf %8, %10 : vector<32x256xf32>
    %c0_12 = arith.constant 0 : index
    %c0_13 = arith.constant 0 : index
    %c0_14 = arith.constant 0 : index
    %12 = vector.load %arg7[%c0_12, %c0_13, %c0_14] : memref<1x32x256xf32, #tpu.memory_space<vmem>>, vector<1x32x256xf32>
    %13 = vector.shape_cast %12 : vector<1x32x256xf32> to vector<32x256xf32>
    %14 = vector.shape_cast %11 : vector<32x256xf32> to vector<1x32x256xf32>
    tpu.vector_store %arg7[%c0_12, %c0_13, %c0_14], %14 {strides = array<i32>} : memref<1x32x256xf32, #tpu.memory_space<vmem>>, vector<1x32x256xf32>,
    return
  }
  func.func @transform_0(%arg0: i32, %arg1: i32) -> (i32, i32, i32) {
    %c0_i32 = arith.constant 0 : i32
    %c0_i32_0 = arith.constant 0 : i32
    return %arg0, %c0_i32, %arg1 : i32, i32, i32
  }
  func.func @transform_1(%arg0: i32, %arg1: i32) -> (i32, i32, i32) {
    %c0_i32 = arith.constant 0 : i32
    %c0_i32_0 = arith.constant 0 : i32
    return %arg0, %c0_i32, %arg1 : i32, i32, i32
  }
  func.func @transform_2(%arg0: i32, %arg1: i32) -> (i32, i32) {
    %c0_i32 = arith.constant 0 : i32
    %c0_i32_0 = arith.constant 0 : i32
    %c0_i32_1 = arith.constant 0 : i32
    return %c0_i32, %c0_i32_0 : i32, i32
  }
  func.func @transform_3(%arg0: i32, %arg1: i32) -> (i32, i32) {
    %c0_i32 = arith.constant 0 : i32
    %c0_i32_0 = arith.constant 0 : i32
    %c0_i32_1 = arith.constant 0 : i32
    return %c0_i32, %c0_i32_0 : i32, i32
  }
  func.func @transform_4(%arg0: i32, %arg1: i32) -> (i32, i32) {
    %c0_i32 = arith.constant 0 : i32
    %c0_i32_0 = arith.constant 0 : i32
    %c0_i32_1 = arith.constant 0 : i32
    return %c0_i32, %c0_i32_0 : i32, i32
  }
  func.func @transform_5(%arg0: i32, %arg1: i32) -> (i32, i32, i32) {
    %c0_i32 = arith.constant 0 : i32
    %c0_i32_0 = arith.constant 0 : i32
    return %arg0, %c0_i32, %arg1 : i32, i32, i32
  }
}

</mosaic_0001>

<llo_original>
// kernel: frescat_area_forward.2
$region0: #{frescat_area_forward.2}
  #allocation0 [shape = 'u32[]', space=smem, size = 0x4, offset = 0x4, fixed_abs, tag = 'smem constant byte address 0x4 - core index']
  #allocation1 [shape = 'u32[72,128]{1,0:T(1,128)}', space=vmem, size = 0x9000, scoped, tag = 'internal scratch']
  %s0 = inlined_call_operand.vmem [shape: f32[2,8,256], index: 0, kind: input, shape index: {}]
  %s1 = inlined_call_operand.vmem [shape: f32[2,8,256], index: 1, kind: input, shape index: {}]
  %s2 = inlined_call_operand.vmem [shape: f32[8,8], index: 2, kind: input, shape index: {}]
  %s3 = inlined_call_operand.vmem [shape: f32[8,1], index: 3, kind: input, shape index: {}]
  %s4 = inlined_call_operand.vmem [shape: f32[8,8], index: 4, kind: input, shape index: {}]
  %s5 = inlined_call_operand.vmem [shape: f32[8,1], index: 5, kind: input, shape index: {}]
  %s6 = inlined_call_operand.vmem [shape: f32[8,8], index: 6, kind: input, shape index: {}]
  %s7 = inlined_call_operand.vmem [shape: f32[8,1], index: 7, kind: input, shape index: {}]
  %s8 = inlined_call_operand.vmem [shape: f32[8,8], index: 8, kind: input, shape index: {}]
  %s9 = inlined_call_operand.vmem [shape: f32[8,1], index: 9, kind: input, shape index: {}]
  %s10 = inlined_call_operand.vmem [shape: f32[2,8,256], index: 10, kind: output, shape index: {0}]
  %s11 = inlined_call_operand.vmem [shape: f32[2,8,256], index: 11, kind: output, shape index: {1}]
  %12 = xla_tuple %s10, %s11
  %s13 = sld [smem:[#allocation0]]
  $region81: #{frescat_area_forward.2} parent=0
    _
  %s15 = ssub.s32 1, %s13
  %s16 = scalar_select 0, %s15, %s13
  loop: start=0, step=1, limit=4
  $region2: #{frescat_area_forward.2} parent=0 // loop_pre_header
    _
  $region3: #{frescat_area_forward.2} parent=0 // loop_header
    %s18 = sphi 0, %s22
    %p19 = scmp.ge.s32.totalorder %s18, 4
    %s25 = sphi 0, %s37
    %s26 = sphi 0, %s33
    %s27 = sphi 0, %s25
    %s28 = sphi 0, %s26
    %s29 = sphi 0, %s27
    %s30 = sphi 0, %s28
    %s42 = sphi 0, %s44
    %s45 = sphi 0, %s42
    %s46 = sphi 0, %s45
    %s62 = sphi 0, %s46
    %s70 = sphi 0, %s72
    %s73 = sphi 0, %s70
    %s74 = sphi 0, %s73
    %s90 = sphi 0, %s74
    %s94 = sphi 0, %s94
    %s96 = sphi 0, %s94
    %s97 = sphi 0, %s96
    %s111 = sphi 0, %s97
    %s115 = sphi 0, %s115
    %s117 = sphi 0, %s115
    %s118 = sphi 0, %s117
    %s132 = sphi 0, %s118
    %s136 = sphi 0, %s136
    %s138 = sphi 0, %s136
    %s139 = sphi 0, %s138
    %s153 = sphi 0, %s139
    %s157 = sphi 0, %s157
    %s159 = sphi 0, %s157
    %s160 = sphi 0, %s159
    %s174 = sphi 0, %s160
    %s178 = sphi 0, %s178
    %s180 = sphi 0, %s178
    %s181 = sphi 0, %s180
    %s195 = sphi 0, %s181
    %s199 = sphi 0, %s199
    %s201 = sphi 0, %s199
    %s202 = sphi 0, %s201
    %s216 = sphi 0, %s202
    %s220 = sphi 0, %s220
    %s222 = sphi 0, %s220
    %s223 = sphi 0, %s222
    %s237 = sphi 0, %s223
    %s241 = sphi 0, %s241
    %s243 = sphi 0, %s241
    %s244 = sphi 0, %s243
    %s258 = sphi 0, %s244
    %s266 = sphi 0, %s268
    %s269 = sphi 0, %s266
    %s270 = sphi 0, %s269
    %s286 = sphi 0, %s270
    %s294 = sphi 0, %s296
    %s297 = sphi 0, %s294
    %s298 = sphi 0, %s297
    %s314 = sphi 0, %s298
  $region4: #{frescat_area_forward.2} parent=0 // loop_header_branch
    %21 = sbr.rel (%p19) target = $region8
  $region5: #{frescat_area_forward.2} parent=0 // loop_body
    %s23 = ssub.s32 %s18, 1
    %s24 = ssub.s32 %s18, 2
    %s31 = sadd.s32 1, %s26
    %p32 = scmp.ge.s32.totalorder %s31, 1
    %s33 = scalar_select %p32, 0, %s31
    %s34 = sadd.s32 1, %s25
    %s35 = scalar_select %p32, %s34, %s25
    %p36 = scmp.ge.s32.totalorder %s35, 2
    %s37 = scalar_select %p36, 0, %s35
    %s38 = ssub.s32 %s25, %s37
    %s39 = ssub.s32 %s26, %s33
    %s40 = sor.u32 %s38, %s39
    %p41 = scmp.eq.s32.totalorder %s40, 0
    %s43 = sadd.s32 %s42, 1
    %s44 = scalar_select %p41, %s42, %s43
    %p47 = pneg %p41
    %p48 = scmp.eq.s32.totalorder %s18, 1
    %p49 = por %p47, %p48
    %p50 = scmp.ne.s32.totalorder %s42, %s45
    %p51 = scmp.eq.s32.totalorder %s18, 0
    %p52 = por %p50, %p51
    %p53 = scmp.ne.s32.totalorder %s42, %s45
    %p54 = scmp.eq.s32.totalorder %s23, 1
    %p55 = por %p53, %p54
    %p56 = scmp.ne.s32.totalorder %s45, %s46
    %p57 = scmp.eq.s32.totalorder %s23, 0
    %p58 = por %p56, %p57
    %p59 = scmp.ne.s32.totalorder %s45, %s46
    %p60 = scmp.eq.s32.totalorder %s24, 1
    %p61 = por %p59, %p60
    %p63 = scmp.ne.s32.totalorder %s46, %s62
    %p64 = scmp.eq.s32.totalorder %s24, 0
    %p65 = por %p63, %p64
    %s66 = ssub.s32 %s25, %s37
    %s67 = ssub.s32 %s26, %s33
    %s68 = sor.u32 %s66, %s67
    %p69 = scmp.eq.s32.totalorder %s68, 0
    %s71 = sadd.s32 %s70, 1
    %s72 = scalar_select %p69, %s70, %s71
    %p75 = pneg %p69
    %p76 = scmp.eq.s32.totalorder %s18, 1
    %p77 = por %p75, %p76
    %p78 = scmp.ne.s32.totalorder %s70, %s73
    %p79 = scmp.eq.s32.totalorder %s18, 0
    %p80 = por %p78, %p79
    %p81 = scmp.ne.s32.totalorder %s70, %s73
    %p82 = scmp.eq.s32.totalorder %s23, 1
    %p83 = por %p81, %p82
    %p84 = scmp.ne.s32.totalorder %s73, %s74
    %p85 = scmp.eq.s32.totalorder %s23, 0
    %p86 = por %p84, %p85
    %p87 = scmp.ne.s32.totalorder %s73, %s74
    %p88 = scmp.eq.s32.totalorder %s24, 1
    %p89 = por %p87, %p88
    %p91 = scmp.ne.s32.totalorder %s74, %s90
    %p92 = scmp.eq.s32.totalorder %s24, 0
    %p93 = por %p91, %p92
    %s95 = sadd.s32 %s94, 1
    %p98 = scmp.eq.s32.totalorder %s18, 1
    %p99 = scmp.ne.s32.totalorder %s94, %s96
    %p100 = scmp.eq.s32.totalorder %s18, 0
    %p101 = por %p99, %p100
    %p102 = scmp.ne.s32.totalorder %s94, %s96
    %p103 = scmp.eq.s32.totalorder %s23, 1
    %p104 = por %p102, %p103
    %p105 = scmp.ne.s32.totalorder %s96, %s97
    %p106 = scmp.eq.s32.totalorder %s23, 0
    %p107 = por %p105, %p106
    %p108 = scmp.ne.s32.totalorder %s96, %s97
    %p109 = scmp.eq.s32.totalorder %s24, 1
    %p110 = por %p108, %p109
    %p112 = scmp.ne.s32.totalorder %s97, %s111
    %p113 = scmp.eq.s32.totalorder %s24, 0
    %p114 = por %p112, %p113
    %s116 = sadd.s32 %s115, 1
    %p119 = scmp.eq.s32.totalorder %s18, 1
    %p120 = scmp.ne.s32.totalorder %s115, %s117
    %p121 = scmp.eq.s32.totalorder %s18, 0
    %p122 = por %p120, %p121
    %p123 = scmp.ne.s32.totalorder %s115, %s117
    %p124 = scmp.eq.s32.totalorder %s23, 1
    %p125 = por %p123, %p124
    %p126 = scmp.ne.s32.totalorder %s117, %s118
    %p127 = scmp.eq.s32.totalorder %s23, 0
    %p128 = por %p126, %p127
    %p129 = scmp.ne.s32.totalorder %s117, %s118
    %p130 = scmp.eq.s32.totalorder %s24, 1
    %p131 = por %p129, %p130
    %p133 = scmp.ne.s32.totalorder %s118, %s132
    %p134 = scmp.eq.s32.totalorder %s24, 0
    %p135 = por %p133, %p134
    %s137 = sadd.s32 %s136, 1
    %p140 = scmp.eq.s32.totalorder %s18, 1
    %p141 = scmp.ne.s32.totalorder %s136, %s138
    %p142 = scmp.eq.s32.totalorder %s18, 0
    %p143 = por %p141, %p142
    %p144 = scmp.ne.s32.totalorder %s136, %s138
    %p145 = scmp.eq.s32.totalorder %s23, 1
    %p146 = por %p144, %p145
    %p147 = scmp.ne.s32.totalorder %s138, %s139
    %p148 = scmp.eq.s32.totalorder %s23, 0
    %p149 = por %p147, %p148
    %p150 = scmp.ne.s32.totalorder %s138, %s139
    %p151 = scmp.eq.s32.totalorder %s24, 1
    %p152 = por %p150, %p151
    %p154 = scmp.ne.s32.totalorder %s139, %s153
    %p155 = scmp.eq.s32.totalorder %s24, 0
    %p156 = por %p154, %p155
    %s158 = sadd.s32 %s157, 1
    %p161 = scmp.eq.s32.totalorder %s18, 1
    %p162 = scmp.ne.s32.totalorder %s157, %s159
    %p163 = scmp.eq.s32.totalorder %s18, 0
    %p164 = por %p162, %p163
    %p165 = scmp.ne.s32.totalorder %s157, %s159
    %p166 = scmp.eq.s32.totalorder %s23, 1
    %p167 = por %p165, %p166
    %p168 = scmp.ne.s32.totalorder %s159, %s160
    %p169 = scmp.eq.s32.totalorder %s23, 0
    %p170 = por %p168, %p169
    %p171 = scmp.ne.s32.totalorder %s159, %s160
    %p172 = scmp.eq.s32.totalorder %s24, 1
    %p173 = por %p171, %p172
    %p175 = scmp.ne.s32.totalorder %s160, %s174
    %p176 = scmp.eq.s32.totalorder %s24, 0
    %p177 = por %p175, %p176
    %s179 = sadd.s32 %s178, 1
    %p182 = scmp.eq.s32.totalorder %s18, 1
    %p183 = scmp.ne.s32.totalorder %s178, %s180
    %p184 = scmp.eq.s32.totalorder %s18, 0
    %p185 = por %p183, %p184
    %p186 = scmp.ne.s32.totalorder %s178, %s180
    %p187 = scmp.eq.s32.totalorder %s23, 1
    %p188 = por %p186, %p187
    %p189 = scmp.ne.s32.totalorder %s180, %s181
    %p190 = scmp.eq.s32.totalorder %s23, 0
    %p191 = por %p189, %p190
    %p192 = scmp.ne.s32.totalorder %s180, %s181
    %p193 = scmp.eq.s32.totalorder %s24, 1
    %p194 = por %p192, %p193
    %p196 = scmp.ne.s32.totalorder %s181, %s195
    %p197 = scmp.eq.s32.totalorder %s24, 0
    %p198 = por %p196, %p197
    %s200 = sadd.s32 %s199, 1
    %p203 = scmp.eq.s32.totalorder %s18, 1
    %p204 = scmp.ne.s32.totalorder %s199, %s201
    %p205 = scmp.eq.s32.totalorder %s18, 0
    %p206 = por %p204, %p205
    %p207 = scmp.ne.s32.totalorder %s199, %s201
    %p208 = scmp.eq.s32.totalorder %s23, 1
    %p209 = por %p207, %p208
    %p210 = scmp.ne.s32.totalorder %s201, %s202
    %p211 = scmp.eq.s32.totalorder %s23, 0
    %p212 = por %p210, %p211
    %p213 = scmp.ne.s32.totalorder %s201, %s202
    %p214 = scmp.eq.s32.totalorder %s24, 1
    %p215 = por %p213, %p214
    %p217 = scmp.ne.s32.totalorder %s202, %s216
    %p218 = scmp.eq.s32.totalorder %s24, 0
    %p219 = por %p217, %p218
    %s221 = sadd.s32 %s220, 1
    %p224 = scmp.eq.s32.totalorder %s18, 1
    %p225 = scmp.ne.s32.totalorder %s220, %s222
    %p226 = scmp.eq.s32.totalorder %s18, 0
    %p227 = por %p225, %p226
    %p228 = scmp.ne.s32.totalorder %s220, %s222
    %p229 = scmp.eq.s32.totalorder %s23, 1
    %p230 = por %p228, %p229
    %p231 = scmp.ne.s32.totalorder %s222, %s223
    %p232 = scmp.eq.s32.totalorder %s23, 0
    %p233 = por %p231, %p232
    %p234 = scmp.ne.s32.totalorder %s222, %s223
    %p235 = scmp.eq.s32.totalorder %s24, 1
    %p236 = por %p234, %p235
    %p238 = scmp.ne.s32.totalorder %s223, %s237
    %p239 = scmp.eq.s32.totalorder %s24, 0
    %p240 = por %p238, %p239
    %s242 = sadd.s32 %s241, 1
    %p245 = scmp.eq.s32.totalorder %s18, 1
    %p246 = scmp.ne.s32.totalorder %s241, %s243
    %p247 = scmp.eq.s32.totalorder %s18, 0
    %p248 = por %p246, %p247
    %p249 = scmp.ne.s32.totalorder %s241, %s243
    %p250 = scmp.eq.s32.totalorder %s23, 1
    %p251 = por %p249, %p250
    %p252 = scmp.ne.s32.totalorder %s243, %s244
    %p253 = scmp.eq.s32.totalorder %s23, 0
    %p254 = por %p252, %p253
    %p255 = scmp.ne.s32.totalorder %s243, %s244
    %p256 = scmp.eq.s32.totalorder %s24, 1
    %p257 = por %p255, %p256
    %p259 = scmp.ne.s32.totalorder %s244, %s258
    %p260 = scmp.eq.s32.totalorder %s24, 0
    %p261 = por %p259, %p260
    %s262 = ssub.s32 %s25, %s37
    %s263 = ssub.s32 %s26, %s33
    %s264 = sor.u32 %s262, %s263
    %p265 = scmp.eq.s32.totalorder %s264, 0
    %s267 = sadd.s32 %s266, 1
    %s268 = scalar_select %p265, %s266, %s267
    %p271 = pneg %p265
    %p272 = scmp.eq.s32.totalorder %s18, 1
    %p273 = por %p271, %p272
    %p274 = scmp.ne.s32.totalorder %s266, %s269
    %p275 = scmp.eq.s32.totalorder %s18, 0
    %p276 = por %p274, %p275
    %p277 = scmp.ne.s32.totalorder %s266, %s269
    %p278 = scmp.eq.s32.totalorder %s23, 1
    %p279 = por %p277, %p278
    %p280 = scmp.ne.s32.totalorder %s269, %s270
    %p281 = scmp.eq.s32.totalorder %s23, 0
    %p282 = por %p280, %p281
    %p283 = scmp.ne.s32.totalorder %s269, %s270
    %p284 = scmp.eq.s32.totalorder %s24, 1
    %p285 = por %p283, %p284
    %p287 = scmp.ne.s32.totalorder %s270, %s286
    %p288 = scmp.eq.s32.totalorder %s24, 0
    %p289 = por %p287, %p288
    %s290 = ssub.s32 %s25, %s37
    %s291 = ssub.s32 %s26, %s33
    %s292 = sor.u32 %s290, %s291
    %p293 = scmp.eq.s32.totalorder %s292, 0
    %s295 = sadd.s32 %s294, 1
    %s296 = scalar_select %p293, %s294, %s295
    %p299 = pneg %p293
    %p300 = scmp.eq.s32.totalorder %s18, 1
    %p301 = por %p299, %p300
    %p302 = scmp.ne.s32.totalorder %s294, %s297
    %p303 = scmp.eq.s32.totalorder %s18, 0
    %p304 = por %p302, %p303
    %p305 = scmp.ne.s32.totalorder %s294, %s297
    %p306 = scmp.eq.s32.totalorder %s23, 1
    %p307 = por %p305, %p306
    %p308 = scmp.ne.s32.totalorder %s297, %s298
    %p309 = scmp.eq.s32.totalorder %s23, 0
    %p310 = por %p308, %p309
    %p311 = scmp.ne.s32.totalorder %s297, %s298
    %p312 = scmp.eq.s32.totalorder %s24, 1
    %p313 = por %p311, %p312
    %p315 = scmp.ne.s32.totalorder %s298, %s314
    %p316 = scmp.eq.s32.totalorder %s24, 0
    %p317 = por %p315, %p316
    %p318 = scmp.le.s32.totalorder 1, %s18
    %p319 = scmp.lt.s32.totalorder %s18, 3
    %p320 = pnand %p318, %p319
    %p321 = pneg %p320
    // Predicated region
    $region9: #{frescat_area_forward.2} parent=5 // pred_check
      _
    $region10: #{frescat_area_forward.2} parent=5 // pred_check_branch
      %323 = sbr.rel (%p320) target = $region12
    $region11: #{frescat_area_forward.2} parent=5 // pred_region
      %s324 = ssub.s32 %s18, 1
      // Predicated region
      $region13: #{frescat_area_forward.2} parent=11 // pred_check
        %p325 = pneg %p107
      $region14: #{frescat_area_forward.2} parent=11 // pred_check_branch
        %327 = sbr.rel (%p325) target = $region16
      $region15: #{frescat_area_forward.2} parent=11 // pred_region
        _
      $region16: #{frescat_area_forward.2} parent=11 // pred_fallthru
        _
      // Predicated region
      $region17: #{frescat_area_forward.2} parent=11 // pred_check
        %p328 = pneg %p128
      $region18: #{frescat_area_forward.2} parent=11 // pred_check_branch
        %330 = sbr.rel (%p328) target = $region20
      $region19: #{frescat_area_forward.2} parent=11 // pred_region
        _
      $region20: #{frescat_area_forward.2} parent=11 // pred_fallthru
        _
      // Predicated region
      $region21: #{frescat_area_forward.2} parent=11 // pred_check
        %p331 = pneg %p149
      $region22: #{frescat_area_forward.2} parent=11 // pred_check_branch
        %333 = sbr.rel (%p331) target = $region24
      $region23: #{frescat_area_forward.2} parent=11 // pred_region
        _
      $region24: #{frescat_area_forward.2} parent=11 // pred_fallthru
        _
      // Predicated region
      $region25: #{frescat_area_forward.2} parent=11 // pred_check
        %p334 = pneg %p170
      $region26: #{frescat_area_forward.2} parent=11 // pred_check_branch
        %336 = sbr.rel (%p334) target = $region28
      $region27: #{frescat_area_forward.2} parent=11 // pred_region
        _
      $region28: #{frescat_area_forward.2} parent=11 // pred_fallthru
        _
      // Predicated region
      $region29: #{frescat_area_forward.2} parent=11 // pred_check
        %p337 = pneg %p191
      $region30: #{frescat_area_forward.2} parent=11 // pred_check_branch
        %339 = sbr.rel (%p337) target = $region32
      $region31: #{frescat_area_forward.2} parent=11 // pred_region
        _
      $region32: #{frescat_area_forward.2} parent=11 // pred_fallthru
        _
      // Predicated region
      $region33: #{frescat_area_forward.2} parent=11 // pred_check
        %p340 = pneg %p212
      $region34: #{frescat_area_forward.2} parent=11 // pred_check_branch
        %342 = sbr.rel (%p340) target = $region36
      $region35: #{frescat_area_forward.2} parent=11 // pred_region
        _
      $region36: #{frescat_area_forward.2} parent=11 // pred_fallthru
        _
      // Predicated region
      $region37: #{frescat_area_forward.2} parent=11 // pred_check
        %p343 = pneg %p233
      $region38: #{frescat_area_forward.2} parent=11 // pred_check_branch
        %345 = sbr.rel (%p343) target = $region40
      $region39: #{frescat_area_forward.2} parent=11 // pred_region
        _
      $region40: #{frescat_area_forward.2} parent=11 // pred_fallthru
        _
      // Predicated region
      $region41: #{frescat_area_forward.2} parent=11 // pred_check
        %p346 = pneg %p254
      $region42: #{frescat_area_forward.2} parent=11 // pred_check_branch
        %348 = sbr.rel (%p346) target = $region44
      $region43: #{frescat_area_forward.2} parent=11 // pred_region
        _
      $region44: #{frescat_area_forward.2} parent=11 // pred_fallthru
        _
    $region12: #{frescat_area_forward.2} parent=5 // pred_fallthru
      _
    %p349 = scmp.lt.s32.totalorder %s18, 2
    // Predicated region
    $region45: #{frescat_area_forward.2} parent=5 // pred_check
      %p350 = pneg %p349
    $region46: #{frescat_area_forward.2} parent=5 // pred_check_branch
      %352 = sbr.rel (%p350) target = $region48
    $region47: #{frescat_area_forward.2} parent=5 // pred_region
      // Predicated region
      $region49: #{frescat_area_forward.2} parent=47 // pred_check
        %p353 = pneg %p52
      $region50: #{frescat_area_forward.2} parent=47 // pred_check_branch
        %355 = sbr.rel (%p353) target = $region52
      $region51: #{frescat_area_forward.2} parent=47 // pred_region
        %s356 = smul.u32 2, %s26
        %p357 = scmp.lt.s32.totalorder %s25, 1
        %s358 = scalar_select %p357, %s25, 1
        %p359 = scmp.lt.s32.totalorder %s356, 1
        %s360 = scalar_select %p359, %s356, 1
        %s361 = smul.addr %s358, 2
        %s362 = sadd.s32 %s360, %s361
        %s363 = smul.addr %s362, 8
        %s364 = scalar_lea.vmem %s0, %s363
        %s365 = smul.u32 2, %s26
      $region52: #{frescat_area_forward.2} parent=47 // pred_fallthru
        _
      // Predicated region
      $region53: #{frescat_area_forward.2} parent=47 // pred_check
        %p366 = pneg %p80
      $region54: #{frescat_area_forward.2} parent=47 // pred_check_branch
        %368 = sbr.rel (%p366) target = $region56
      $region55: #{frescat_area_forward.2} parent=47 // pred_region
        %s369 = smul.u32 2, %s26
        %p370 = scmp.lt.s32.totalorder %s25, 1
        %s371 = scalar_select %p370, %s25, 1
        %p372 = scmp.lt.s32.totalorder %s369, 1
        %s373 = scalar_select %p372, %s369, 1
        %s374 = smul.addr %s371, 2
        %s375 = sadd.s32 %s373, %s374
        %s376 = smul.addr %s375, 8
        %s377 = scalar_lea.vmem %s1, %s376
        %s378 = smul.u32 2, %s26
      $region56: #{frescat_area_forward.2} parent=47 // pred_fallthru
        _
    $region48: #{frescat_area_forward.2} parent=5 // pred_fallthru
      _
    %p379 = scmp.le.s32.totalorder 1, %s18
    %p380 = scmp.lt.s32.totalorder %s18, 3
    %p381 = pnand %p379, %p380
    %p382 = pneg %p381
    // Predicated region
    $region57: #{frescat_area_forward.2} parent=5 // pred_check
      _
    $region58: #{frescat_area_forward.2} parent=5 // pred_check_branch
      %384 = sbr.rel (%p381) target = $region60
    $region59: #{frescat_area_forward.2} parent=5 // pred_region
      %s385 = ssub.s32 %s18, 1
      %s386 = smul.u32 2, %s28
      %p387 = scmp.lt.s32.totalorder %s27, 1
      %s388 = scalar_select %p387, %s27, 1
      %p389 = scmp.lt.s32.totalorder %s386, 1
      %s390 = scalar_select %p389, %s386, 1
      %s391 = smul.addr %s388, 2
      %s392 = sadd.s32 %s390, %s391
      %s393 = smul.addr %s392, 8
      %s394 = scalar_lea.vmem %s0, %s393
      %p395 = pneg %p58
      %p396 = pneg %p55
      %s397 = smul.u32 2, %s28
      %p398 = scmp.lt.s32.totalorder %s27, 1
      %s399 = scalar_select %p398, %s27, 1
      %p400 = scmp.lt.s32.totalorder %s397, 1
      %s401 = scalar_select %p400, %s397, 1
      %s402 = smul.addr %s399, 2
      %s403 = sadd.s32 %s401, %s402
      %s404 = smul.addr %s403, 8
      %s405 = scalar_lea.vmem %s1, %s404
      %p406 = pneg %p86
      %p407 = pneg %p83
      %p408 = pneg %p107
      %p409 = pneg %p104
      %p410 = pneg %p128
      %p411 = pneg %p125
      %p412 = pneg %p149
      %p413 = pneg %p146
      %p414 = pneg %p170
      %p415 = pneg %p167
      %p416 = pneg %p191
      %p417 = pneg %p188
      %p418 = pneg %p212
      %p419 = pneg %p209
      %p420 = pneg %p233
      %p421 = pneg %p230
      %p422 = pneg %p254
      %p423 = pneg %p251
      %p424 = pneg %p282
      %p425 = pneg %p279
      %s426 = smul.u32 2, %s28
      %p427 = scmp.lt.s32.totalorder %s27, 1
      %s428 = scalar_select %p427, %s27, 1
      %p429 = scmp.lt.s32.totalorder %s426, 1
      %s430 = scalar_select %p429, %s426, 1
      %s431 = smul.addr %s428, 2
      %s432 = sadd.s32 %s430, %s431
      %s433 = smul.addr %s432, 8
      %s434 = scalar_lea.vmem %s10, %s433
      %p435 = pneg %p310
      %p436 = pneg %p307
      %s437 = smul.u32 2, %s28
      %p438 = scmp.lt.s32.totalorder %s27, 1
      %s439 = scalar_select %p438, %s27, 1
      %p440 = scmp.lt.s32.totalorder %s437, 1
      %s441 = scalar_select %p440, %s437, 1
      %s442 = smul.addr %s439, 2
      %s443 = sadd.s32 %s441, %s442
      %s444 = smul.addr %s443, 8
      %s445 = scalar_lea.vmem %s11, %s444
      %s446 = smul.u32 2, %s28
      %p447 = scmp.lt.s32.totalorder %s27, 1
      %s448 = scalar_select %p447, %s27, 1
      %p449 = scmp.lt.s32.totalorder %s446, 1
      %s450 = scalar_select %p449, %s446, 1
      %s451 = smul.addr %s448, 2
      %s452 = sadd.s32 %s450, %s451
      %s453 = smul.addr %s452, 8
      %s454 = scalar_lea.vmem %s0, %s453
      %s455 = smul.u32 2, %s28
      %s456 = smul.u32 2, %s28
      %p457 = scmp.lt.s32.totalorder %s27, 1
      %s458 = scalar_select %p457, %s27, 1
      %p459 = scmp.lt.s32.totalorder %s456, 1
      %s460 = scalar_select %p459, %s456, 1
      %s461 = smul.addr %s458, 2
      %s462 = sadd.s32 %s460, %s461
      %s463 = smul.addr %s462, 8
      %s464 = scalar_lea.vmem %s1, %s463
      %s465 = smul.u32 2, %s28
      %s466 = smul.u32 2, %s28
      %p467 = scmp.lt.s32.totalorder %s27, 1
      %s468 = scalar_select %p467, %s27, 1
      %p469 = scmp.lt.s32.totalorder %s466, 1
      %s470 = scalar_select %p469, %s466, 1
      %s471 = smul.addr %s468, 2
      %s472 = sadd.s32 %s470, %s471
      %s473 = smul.addr %s472, 8
      %s474 = scalar_lea.vmem %s10, %s473
      %s475 = smul.u32 2, %s28
      %s476 = smul.u32 2, %s28
      %p477 = scmp.lt.s32.totalorder %s27, 1
      %s478 = scalar_select %p477, %s27, 1
      %p479 = scmp.lt.s32.totalorder %s476, 1
      %s480 = scalar_select %p479, %s476, 1
      %s481 = smul.addr %s478, 2
      %s482 = sadd.s32 %s480, %s481
      %s483 = smul.addr %s482, 8
      %s484 = scalar_lea.vmem %s11, %s483
      %s485 = smul.u32 2, %s28
      %v486 = vld [vmem:[%s454] sm:$0xff]
      %v487 = vld [vmem:[%s454 + $0x8] sm:$0xff]
      %v488 = vld [vmem:[%s464] sm:$0xff]
      %v489 = vld [vmem:[%s464 + $0x8] sm:$0xff]
      %v490 = vld [vmem:[%s2] sm:$0xff]
      %v491 = vld [vmem:[%s3] sm:$0xff]
      %493 = vset.pattern.permute.xlu0 0
      %494 = vperm.xlu0 %493, %v491
      %v495 = vpop.permute.xlu0 %494
      %vm497 = vcmask 64512
      %v499 = vsel %vm497, %v490, 0
      %501 = vmatpush.msra.mxu0 0.0
      %502 = vmatpush.msra.mxu0 0.0
      %503 = vmatpush.msra.mxu0 0.0
      %504 = vmatpush.msra.mxu0 0.0
      %505 = vmatpush.msra.mxu0 0.0
      %506 = vmatpush.msra.mxu0 0.0
      %507 = vmatpush.msra.mxu0 0.0
      %508 = vmatpush.msra.mxu0 0.0
      %509 = vmatpush.msra.mxu0 0.0
      %510 = vmatpush.msra.mxu0 0.0
      %511 = vmatpush.msra.mxu0 0.0
      %512 = vmatpush.msra.mxu0 0.0
      %513 = vmatpush.msra.mxu0 0.0
      %514 = vmatpush.msra.mxu0 0.0
      %515 = vmatpush.msra.mxu0 0.0
      %516 = vmatpush.msra.mxu0 %v486
      %517 = vmatmul.f32.gmra.mxu0 %v499
      %v518 = vpop.f32.mrf.mxu0
      %v519 = vadd.f32 %v495, %v518
      %520 = vdwg.mxu0
      %521 = vmatpush.msra.mxu0 0.0
      %522 = vmatpush.msra.mxu0 0.0
      %523 = vmatpush.msra.mxu0 0.0
      %524 = vmatpush.msra.mxu0 0.0
      %525 = vmatpush.msra.mxu0 0.0
      %526 = vmatpush.msra.mxu0 0.0
      %527 = vmatpush.msra.mxu0 0.0
      %528 = vmatpush.msra.mxu0 0.0
      %529 = vmatpush.msra.mxu0 0.0
      %530 = vmatpush.msra.mxu0 0.0
      %531 = vmatpush.msra.mxu0 0.0
      %532 = vmatpush.msra.mxu0 0.0
      %533 = vmatpush.msra.mxu0 0.0
      %534 = vmatpush.msra.mxu0 0.0
      %535 = vmatpush.msra.mxu0 0.0
      %536 = vmatpush.msra.mxu0 %v487
      %537 = vmatmul.f32.gmra.mxu0 %v499
      %v538 = vpop.f32.mrf.mxu0
      %v539 = vadd.f32 %v495, %v538
      %540 = vdwg.mxu0
      %vm541 = vcmp.ge.f32.partialorder %v519, 0.0
      %vm542 = vcmp.ge.f32.partialorder %v539, 0.0
      %v543 = vmul.f32 %v519, 0.1
      %v544 = vmul.f32 %v539, 0.1
      %v545 = vsel %vm541, %v519, %v543
      %v546 = vsel %vm542, %v539, %v544
      %v547 = vld [vmem:[%s4] sm:$0xff]
      %v548 = vld [vmem:[%s5] sm:$0xff]
      %550 = vset.pattern.permute.xlu0 0
      %551 = vperm.xlu0 %550, %v548
      %v552 = vpop.permute.xlu0 %551
      %v555 = vsel %vm497, %v547, 0
      %557 = vmatpush.msra.mxu0 0.0
      %558 = vmatpush.msra.mxu0 0.0
      %559 = vmatpush.msra.mxu0 0.0
      %560 = vmatpush.msra.mxu0 0.0
      %561 = vmatpush.msra.mxu0 0.0
      %562 = vmatpush.msra.mxu0 0.0
      %563 = vmatpush.msra.mxu0 0.0
      %564 = vmatpush.msra.mxu0 0.0
      %565 = vmatpush.msra.mxu0 0.0
      %566 = vmatpush.msra.mxu0 0.0
      %567 = vmatpush.msra.mxu0 0.0
      %568 = vmatpush.msra.mxu0 0.0
      %569 = vmatpush.msra.mxu0 0.0
      %570 = vmatpush.msra.mxu0 0.0
      %571 = vmatpush.msra.mxu0 0.0
      %572 = vmatpush.msra.mxu0 %v545
      %573 = vmatmul.f32.gmra.mxu0 %v555
      %v574 = vpop.f32.mrf.mxu0
      %v575 = vadd.f32 %v552, %v574
      %576 = vdwg.mxu0
      %577 = vmatpush.msra.mxu0 0.0
      %578 = vmatpush.msra.mxu0 0.0
      %579 = vmatpush.msra.mxu0 0.0
      %580 = vmatpush.msra.mxu0 0.0
      %581 = vmatpush.msra.mxu0 0.0
      %582 = vmatpush.msra.mxu0 0.0
      %583 = vmatpush.msra.mxu0 0.0
      %584 = vmatpush.msra.mxu0 0.0
      %585 = vmatpush.msra.mxu0 0.0
      %586 = vmatpush.msra.mxu0 0.0
      %587 = vmatpush.msra.mxu0 0.0
      %588 = vmatpush.msra.mxu0 0.0
      %589 = vmatpush.msra.mxu0 0.0
      %590 = vmatpush.msra.mxu0 0.0
      %591 = vmatpush.msra.mxu0 0.0
      %592 = vmatpush.msra.mxu0 %v546
      %593 = vmatmul.f32.gmra.mxu0 %v555
      %v594 = vpop.f32.mrf.mxu0
      %v595 = vadd.f32 %v552, %v594
      %596 = vdwg.mxu0
      %v597 = vld [vmem:[%s6] sm:$0xff]
      %v598 = vld [vmem:[%s7] sm:$0xff]
      %600 = vset.pattern.permute.xlu0 0
      %601 = vperm.xlu0 %600, %v598
      %v602 = vpop.permute.xlu0 %601
      %v605 = vsel %vm497, %v597, 0
      %607 = vmatpush.msra.mxu0 0.0
      %608 = vmatpush.msra.mxu0 0.0
      %609 = vmatpush.msra.mxu0 0.0
      %610 = vmatpush.msra.mxu0 0.0
      %611 = vmatpush.msra.mxu0 0.0
      %612 = vmatpush.msra.mxu0 0.0
      %613 = vmatpush.msra.mxu0 0.0
      %614 = vmatpush.msra.mxu0 0.0
      %615 = vmatpush.msra.mxu0 0.0
      %616 = vmatpush.msra.mxu0 0.0
      %617 = vmatpush.msra.mxu0 0.0
      %618 = vmatpush.msra.mxu0 0.0
      %619 = vmatpush.msra.mxu0 0.0
      %620 = vmatpush.msra.mxu0 0.0
      %621 = vmatpush.msra.mxu0 0.0
      %622 = vmatpush.msra.mxu0 %v488
      %623 = vmatmul.f32.gmra.mxu0 %v605
      %v624 = vpop.f32.mrf.mxu0
      %v625 = vadd.f32 %v602, %v624
      %626 = vdwg.mxu0
      %627 = vmatpush.msra.mxu0 0.0
      %628 = vmatpush.msra.mxu0 0.0
      %629 = vmatpush.msra.mxu0 0.0
      %630 = vmatpush.msra.mxu0 0.0
      %631 = vmatpush.msra.mxu0 0.0
      %632 = vmatpush.msra.mxu0 0.0
      %633 = vmatpush.msra.mxu0 0.0
      %634 = vmatpush.msra.mxu0 0.0
      %635 = vmatpush.msra.mxu0 0.0
      %636 = vmatpush.msra.mxu0 0.0
      %637 = vmatpush.msra.mxu0 0.0
      %638 = vmatpush.msra.mxu0 0.0
      %639 = vmatpush.msra.mxu0 0.0
      %640 = vmatpush.msra.mxu0 0.0
      %641 = vmatpush.msra.mxu0 0.0
      %642 = vmatpush.msra.mxu0 %v489
      %643 = vmatmul.f32.gmra.mxu0 %v605
      %v644 = vpop.f32.mrf.mxu0
      %v645 = vadd.f32 %v602, %v644
      %646 = vdwg.mxu0
      %vm647 = vcmp.ge.f32.partialorder %v625, 0.0
      %vm648 = vcmp.ge.f32.partialorder %v645, 0.0
      %v649 = vmul.f32 %v625, 0.1
      %v650 = vmul.f32 %v645, 0.1
      %v651 = vsel %vm647, %v625, %v649
      %v652 = vsel %vm648, %v645, %v650
      %v653 = vld [vmem:[%s8] sm:$0xff]
      %v654 = vld [vmem:[%s9] sm:$0xff]
      %656 = vset.pattern.permute.xlu0 0
      %657 = vperm.xlu0 %656, %v654
      %v658 = vpop.permute.xlu0 %657
      %v661 = vsel %vm497, %v653, 0
      %663 = vmatpush.msra.mxu0 0.0
      %664 = vmatpush.msra.mxu0 0.0
      %665 = vmatpush.msra.mxu0 0.0
      %666 = vmatpush.msra.mxu0 0.0
      %667 = vmatpush.msra.mxu0 0.0
      %668 = vmatpush.msra.mxu0 0.0
      %669 = vmatpush.msra.mxu0 0.0
      %670 = vmatpush.msra.mxu0 0.0
      %671 = vmatpush.msra.mxu0 0.0
      %672 = vmatpush.msra.mxu0 0.0
      %673 = vmatpush.msra.mxu0 0.0
      %674 = vmatpush.msra.mxu0 0.0
      %675 = vmatpush.msra.mxu0 0.0
      %676 = vmatpush.msra.mxu0 0.0
      %677 = vmatpush.msra.mxu0 0.0
      %678 = vmatpush.msra.mxu0 %v651
      %679 = vmatmul.f32.gmra.mxu0 %v661
      %v680 = vpop.f32.mrf.mxu0
      %v681 = vadd.f32 %v658, %v680
      %682 = vdwg.mxu0
      %683 = vmatpush.msra.mxu0 0.0
      %684 = vmatpush.msra.mxu0 0.0
      %685 = vmatpush.msra.mxu0 0.0
      %686 = vmatpush.msra.mxu0 0.0
      %687 = vmatpush.msra.mxu0 0.0
      %688 = vmatpush.msra.mxu0 0.0
      %689 = vmatpush.msra.mxu0 0.0
      %690 = vmatpush.msra.mxu0 0.0
      %691 = vmatpush.msra.mxu0 0.0
      %692 = vmatpush.msra.mxu0 0.0
      %693 = vmatpush.msra.mxu0 0.0
      %694 = vmatpush.msra.mxu0 0.0
      %695 = vmatpush.msra.mxu0 0.0
      %696 = vmatpush.msra.mxu0 0.0
      %697 = vmatpush.msra.mxu0 0.0
      %698 = vmatpush.msra.mxu0 %v652
      %699 = vmatmul.f32.gmra.mxu0 %v661
      %v700 = vpop.f32.mrf.mxu0
      %v701 = vadd.f32 %v658, %v700
      %702 = vdwg.mxu0
      %v703 = vand.u32 2147483647, %v681
      %vm704 = vcmp.le.f32.partialorder %v703, 0.7853982
      %vm705 = vcmp.lt.s32.totalorder %v681, 0
      %v706 = vand.u32 %v681, 2139095040
      %v707 = vshrl.u32 %v706, 23
      %v708 = vsub.s32 %v707, 127
      %v709 = vand.u32 2147483647, %v681
      %v710 = vand.u32 %v709, 8388607
      %v711 = vor.u32 %v710, 8388608
      %v712 = vsub.s32 0, %v711
      %v713 = vadd.s32 %v708, 1
      %vm714 = vcmp.gt.s32.totalorder %v713, 0
      %v715 = vsel %vm714, %v713, 0
      %v716 = vshrl.u32 %v715, 5
      %v717 = vand.u32 %v715, 31
      %v718 = vsub.s32 32, %v717
      %v719 = vshrl.u32 683565275, %v718
      %v720 = vshll.u32 683565275, %v717
      %v721 = vshrl.u32 2475754826, %v718
      %v722 = vor.u32 %v720, %v721
      %v723 = vshll.u32 2475754826, %v717
      %v724 = vshrl.u32 2131351028, %v718
      %v725 = vor.u32 %v723, %v724
      %v726 = vshll.u32 2131351028, %v717
      %v727 = vshrl.u32 2102212464, %v718
      %v728 = vor.u32 %v726, %v727
      %v729 = vshll.u32 2102212464, %v717
      %v730 = vshrl.u32 920167782, %v718
      %v731 = vor.u32 %v729, %v730
      %v732 = vshll.u32 920167782, %v717
      %v733 = vshrl.u32 1326507024, %v718
      %v734 = vor.u32 %v732, %v733
      %vm735 = vcmp.lt.s32.totalorder %v716, 1
      %vm736 = vcmp.lt.s32.totalorder %v716, 2
      %vm737 = vcmp.lt.s32.totalorder %v716, 3
      %vm738 = vcmp.lt.s32.totalorder %v716, 4
      %v739 = vsel %vm735, %v719, %v722
      %v740 = vsel %vm738, %v728, 2102212464
      %v741 = vsel %vm737, %v725, %v740
      %v742 = vsel %vm736, %v739, %v741
      %v743 = vsel %vm735, %v722, %v725
      %v744 = vsel %vm738, %v731, 920167782
      %v745 = vsel %vm737, %v728, %v744
      %v746 = vsel %vm736, %v743, %v745
      %v747 = vsel %vm735, %v725, %v728
      %v748 = vsel %vm738, %v734, 1326507024
      %v749 = vsel %vm737, %v731, %v748
      %v750 = vsel %vm736, %v747, %v749
      %v751 = vshll.u32 %v711, 8
      %v752 = vand.u32 %v751, 65535
      %v753 = vshrl.u32 %v751, 16
      %v754 = vand.u32 %v750, 65535
      %v755 = vshrl.u32 %v750, 16
      %v756 = vmul.u32 %v752, %v754
      %v757 = vmul.u32 %v752, %v755
      %v758 = vmul.u32 %v753, %v754
      %v759 = vmul.u32 %v753, %v755
      %v760 = vshll.u32 %v757, 16
      %v761 = vshrl.u32 %v757, 16
      %v762 = vshll.u32 %v758, 16
      %v763 = vshrl.u32 %v758, 16
      %vm764 = vc.u32 %v756, %v760
      %v765 = vsel %vm764, 1, 0
      %v766 = vadd.s32 %v756, %v760
      %v767 = vadd.s32 %v759, %v765
      %vm768 = vc.u32 %v766, %v762
      %v769 = vsel %vm768, 1, 0
      %v770 = vadd.s32 %v766, %v762
      %v771 = vadd.s32 %v767, %v769
      %v772 = vadd.s32 %v771, %v761
      %v773 = vadd.s32 %v772, %v763
      %v774 = vand.u32 %v751, 65535
      %v775 = vshrl.u32 %v751, 16
      %v776 = vand.u32 %v746, 65535
      %v777 = vshrl.u32 %v746, 16
      %v778 = vmul.u32 %v774, %v776
      %v779 = vmul.u32 %v774, %v777
      %v780 = vmul.u32 %v775, %v776
      %v781 = vmul.u32 %v775, %v777
      %v782 = vshll.u32 %v779, 16
      %v783 = vshrl.u32 %v779, 16
      %v784 = vshll.u32 %v780, 16
      %v785 = vshrl.u32 %v780, 16
      %vm786 = vc.u32 %v778, %v782
      %v787 = vsel %vm786, 1, 0
      %v788 = vadd.s32 %v778, %v782
      %v789 = vadd.s32 %v781, %v787
      %vm790 = vc.u32 %v788, %v784
      %v791 = vsel %vm790, 1, 0
      %v792 = vadd.s32 %v788, %v784
      %v793 = vadd.s32 %v789, %v791
      %v794 = vadd.s32 %v793, %v783
      %v795 = vadd.s32 %v794, %v785
      %v796 = vmul.u32 %v751, %v742
      %v797 = vadd.s32 %v773, %v792
      %vm798 = vc.u32 %v773, %v792
      %v799 = vadd.s32 %v795, 1
      %v800 = vsel %vm798, %v799, %v795
      %v801 = vadd.s32 %v796, %v800
      %v802 = vadd.s32 %v801, 536870912
      %v803 = vshrl.u32 %v802, 30
      %v804 = vshll.u32 %v803, 30
      %v805 = vsub.s32 %v801, %v804
      %vm806 = vcmp.lt.s32.totalorder %v805, 0
      %v807 = vsub.s32 0, %v805
      %v808 = vsel %vm806, %v807, %v805
      %v809 = vclz %v808
      %v810 = vsub.s32 %v809, 2
      %vm811 = vcmp.gt.s32.totalorder 0, %v810
      %v812 = vsel %vm811, 0, %v810
      %v813 = vsub.s32 32, %v812
      %v814 = vshll.u32 %v805, %v812
      %v815 = vshrl.u32 %v797, %v813
      %v816 = vor.u32 %v814, %v815
      %v817 = vsub.s32 4294967266, %v812
      %v818 = vadd.s32 %v817, 127
      %v819 = vshll.u32 %v818, 23
      %v820 = vor.u32 4788187, %v819
      %v821 = vand.u32 2147483647, %v820
      %v823 = vcvt.s32.f32 %v816
      %v824 = vmul.f32 %v823, %v821
      %v825 = vxor.u32 %v824, 2147483648
      %v826 = vsel %vm705, %v825, %v824
      %v827 = vsub.s32 4, %v803
      %v828 = vsel %vm705, %v827, %v803
      %v829 = vsel %vm704, %v681, %v826
      %v830 = vsel %vm704, 0, %v828
      %v831 = vmul.f32 %v829, %v829
      %v832 = vmul.f32 %v831, -0.001358992
      %v833 = vadd.f32 %v832, 0.041655596
      %v834 = vmul.f32 %v831, %v833
      %v835 = vadd.f32 %v834, -0.4999988
      %v836 = vmul.f32 %v831, %v835
      %v837 = vadd.f32 1.0, %v836
      %v838 = vmul.f32 %v829, %v829
      %v839 = vmul.f32 %v838, -0.00019511016
      %v840 = vadd.f32 %v839, 0.008332121
      %v841 = vmul.f32 %v838, %v840
      %v842 = vadd.f32 %v841, -0.16666654
      %v843 = vmul.f32 %v838, %v842
      %v844 = vadd.f32 %v843, 1.0
      %v845 = vmul.f32 %v844, %v829
      %vm846 = vweird.f32 %v681
      %v847 = vand.u32 %v830, 3
      %vm848 = vcmp.lt.s32.totalorder %v847, 2
      %vm849 = vcmp.eq.s32.totalorder %v847, 0
      %v850 = vxor.u32 %v845, 2147483648
      %v851 = vsel %vm849, %v837, %v850
      %vm852 = vcmp.eq.s32.totalorder %v847, 2
      %v853 = vxor.u32 %v837, 2147483648
      %v854 = vsel %vm852, %v853, %v845
      %v855 = vsel %vm848, %v851, %v854
      %v856 = vsel %vm846, nan, %v855
      %v857 = vand.u32 2147483647, %v701
      %vm858 = vcmp.le.f32.partialorder %v857, 0.7853982
      %vm859 = vcmp.lt.s32.totalorder %v701, 0
      %v860 = vand.u32 %v701, 2139095040
      %v861 = vshrl.u32 %v860, 23
      %v862 = vsub.s32 %v861, 127
      %v863 = vand.u32 2147483647, %v701
      %v864 = vand.u32 %v863, 8388607
      %v865 = vor.u32 %v864, 8388608
      %v866 = vsub.s32 0, %v865
      %v867 = vadd.s32 %v862, 1
      %vm868 = vcmp.gt.s32.totalorder %v867, 0
      %v869 = vsel %vm868, %v867, 0
      %v870 = vshrl.u32 %v869, 5
      %v871 = vand.u32 %v869, 31
      %v872 = vsub.s32 32, %v871
      %v873 = vshrl.u32 683565275, %v872
      %v874 = vshll.u32 683565275, %v871
      %v875 = vshrl.u32 2475754826, %v872
      %v876 = vor.u32 %v874, %v875
      %v877 = vshll.u32 2475754826, %v871
      %v878 = vshrl.u32 2131351028, %v872
      %v879 = vor.u32 %v877, %v878
      %v880 = vshll.u32 2131351028, %v871
      %v881 = vshrl.u32 2102212464, %v872
      %v882 = vor.u32 %v880, %v881
      %v883 = vshll.u32 2102212464, %v871
      %v884 = vshrl.u32 920167782, %v872
      %v885 = vor.u32 %v883, %v884
      %v886 = vshll.u32 920167782, %v871
      %v887 = vshrl.u32 1326507024, %v872
      %v888 = vor.u32 %v886, %v887
      %vm889 = vcmp.lt.s32.totalorder %v870, 1
      %vm890 = vcmp.lt.s32.totalorder %v870, 2
      %vm891 = vcmp.lt.s32.totalorder %v870, 3
      %vm892 = vcmp.lt.s32.totalorder %v870, 4
      %v893 = vsel %vm889, %v873, %v876
      %v894 = vsel %vm892, %v882, 2102212464
      %v895 = vsel %vm891, %v879, %v894
      %v896 = vsel %vm890, %v893, %v895
      %v897 = vsel %vm889, %v876, %v879
      %v898 = vsel %vm892, %v885, 920167782
      %v899 = vsel %vm891, %v882, %v898
      %v900 = vsel %vm890, %v897, %v899
      %v901 = vsel %vm889, %v879, %v882
      %v902 = vsel %vm892, %v888, 1326507024
      %v903 = vsel %vm891, %v885, %v902
      %v904 = vsel %vm890, %v901, %v903
      %v905 = vshll.u32 %v865, 8
      %v906 = vand.u32 %v905, 65535
      %v907 = vshrl.u32 %v905, 16
      %v908 = vand.u32 %v904, 65535
      %v909 = vshrl.u32 %v904, 16
      %v910 = vmul.u32 %v906, %v908
      %v911 = vmul.u32 %v906, %v909
      %v912 = vmul.u32 %v907, %v908
      %v913 = vmul.u32 %v907, %v909
      %v914 = vshll.u32 %v911, 16
      %v915 = vshrl.u32 %v911, 16
      %v916 = vshll.u32 %v912, 16
      %v917 = vshrl.u32 %v912, 16
      %vm918 = vc.u32 %v910, %v914
      %v919 = vsel %vm918, 1, 0
      %v920 = vadd.s32 %v910, %v914
      %v921 = vadd.s32 %v913, %v919
      %vm922 = vc.u32 %v920, %v916
      %v923 = vsel %vm922, 1, 0
      %v924 = vadd.s32 %v920, %v916
      %v925 = vadd.s32 %v921, %v923
      %v926 = vadd.s32 %v925, %v915
      %v927 = vadd.s32 %v926, %v917
      %v928 = vand.u32 %v905, 65535
      %v929 = vshrl.u32 %v905, 16
      %v930 = vand.u32 %v900, 65535
      %v931 = vshrl.u32 %v900, 16
      %v932 = vmul.u32 %v928, %v930
      %v933 = vmul.u32 %v928, %v931
      %v934 = vmul.u32 %v929, %v930
      %v935 = vmul.u32 %v929, %v931
      %v936 = vshll.u32 %v933, 16
      %v937 = vshrl.u32 %v933, 16
      %v938 = vshll.u32 %v934, 16
      %v939 = vshrl.u32 %v934, 16
      %vm940 = vc.u32 %v932, %v936
      %v941 = vsel %vm940, 1, 0
      %v942 = vadd.s32 %v932, %v936
      %v943 = vadd.s32 %v935, %v941
      %vm944 = vc.u32 %v942, %v938
      %v945 = vsel %vm944, 1, 0
      %v946 = vadd.s32 %v942, %v938
      %v947 = vadd.s32 %v943, %v945
      %v948 = vadd.s32 %v947, %v937
      %v949 = vadd.s32 %v948, %v939
      %v950 = vmul.u32 %v905, %v896
      %v951 = vadd.s32 %v927, %v946
      %vm952 = vc.u32 %v927, %v946
      %v953 = vadd.s32 %v949, 1
      %v954 = vsel %vm952, %v953, %v949
      %v955 = vadd.s32 %v950, %v954
      %v956 = vadd.s32 %v955, 536870912
      %v957 = vshrl.u32 %v956, 30
      %v958 = vshll.u32 %v957, 30
      %v959 = vsub.s32 %v955, %v958
      %vm960 = vcmp.lt.s32.totalorder %v959, 0
      %v961 = vsub.s32 0, %v959
      %v962 = vsel %vm960, %v961, %v959
      %v963 = vclz %v962
      %v964 = vsub.s32 %v963, 2
      %vm965 = vcmp.gt.s32.totalorder 0, %v964
      %v966 = vsel %vm965, 0, %v964
      %v967 = vsub.s32 32, %v966
      %v968 = vshll.u32 %v959, %v966
      %v969 = vshrl.u32 %v951, %v967
      %v970 = vor.u32 %v968, %v969
      %v971 = vsub.s32 4294967266, %v966
      %v972 = vadd.s32 %v971, 127
      %v973 = vshll.u32 %v972, 23
      %v974 = vor.u32 4788187, %v973
      %v975 = vand.u32 2147483647, %v974
      %v977 = vcvt.s32.f32 %v970
      %v978 = vmul.f32 %v977, %v975
      %v979 = vxor.u32 %v978, 2147483648
      %v980 = vsel %vm859, %v979, %v978
      %v981 = vsub.s32 4, %v957
      %v982 = vsel %vm859, %v981, %v957
      %v983 = vsel %vm858, %v701, %v980
      %v984 = vsel %vm858, 0, %v982
      %v985 = vmul.f32 %v983, %v983
      %v986 = vmul.f32 %v985, -0.001358992
      %v987 = vadd.f32 %v986, 0.041655596
      %v988 = vmul.f32 %v985, %v987
      %v989 = vadd.f32 %v988, -0.4999988
      %v990 = vmul.f32 %v985, %v989
      %v991 = vadd.f32 1.0, %v990
      %v992 = vmul.f32 %v983, %v983
      %v993 = vmul.f32 %v992, -0.00019511016
      %v994 = vadd.f32 %v993, 0.008332121
      %v995 = vmul.f32 %v992, %v994
      %v996 = vadd.f32 %v995, -0.16666654
      %v997 = vmul.f32 %v992, %v996
      %v998 = vadd.f32 %v997, 1.0
      %v999 = vmul.f32 %v998, %v983
      %vm1000 = vweird.f32 %v701
      %v1001 = vand.u32 %v984, 3
      %vm1002 = vcmp.lt.s32.totalorder %v1001, 2
      %vm1003 = vcmp.eq.s32.totalorder %v1001, 0
      %v1004 = vxor.u32 %v999, 2147483648
      %v1005 = vsel %vm1003, %v991, %v1004
      %vm1006 = vcmp.eq.s32.totalorder %v1001, 2
      %v1007 = vxor.u32 %v991, 2147483648
      %v1008 = vsel %vm1006, %v1007, %v999
      %v1009 = vsel %vm1002, %v1005, %v1008
      %v1010 = vsel %vm1000, nan, %v1009
      %v1011 = vmul.f32 %v575, %v856
      %v1012 = vmul.f32 %v595, %v1010
      %1013 = vst [vmem:[%s474] sm:$0xff] %v1011
      %1014 = vst [vmem:[%s474 + $0x8] sm:$0xff] %v1012
      %v1015 = vand.u32 2147483647, %v681
      %vm1016 = vcmp.le.f32.partialorder %v1015, 0.7853982
      %vm1017 = vcmp.lt.s32.totalorder %v681, 0
      %v1018 = vand.u32 %v681, 2139095040
      %v1019 = vshrl.u32 %v1018, 23
      %v1020 = vsub.s32 %v1019, 127
      %v1021 = vand.u32 2147483647, %v681
      %v1022 = vand.u32 %v1021, 8388607
      %v1023 = vor.u32 %v1022, 8388608
      %v1024 = vsub.s32 0, %v1023
      %v1025 = vadd.s32 %v1020, 1
      %vm1026 = vcmp.gt.s32.totalorder %v1025, 0
      %v1027 = vsel %vm1026, %v1025, 0
      %v1028 = vshrl.u32 %v1027, 5
      %v1029 = vand.u32 %v1027, 31
      %v1030 = vsub.s32 32, %v1029
      %v1031 = vshrl.u32 683565275, %v1030
      %v1032 = vshll.u32 683565275, %v1029
      %v1033 = vshrl.u32 2475754826, %v1030
      %v1034 = vor.u32 %v1032, %v1033
      %v1035 = vshll.u32 2475754826, %v1029
      %v1036 = vshrl.u32 2131351028, %v1030
      %v1037 = vor.u32 %v1035, %v1036
      %v1038 = vshll.u32 2131351028, %v1029
      %v1039 = vshrl.u32 2102212464, %v1030
      %v1040 = vor.u32 %v1038, %v1039
      %v1041 = vshll.u32 2102212464, %v1029
      %v1042 = vshrl.u32 920167782, %v1030
      %v1043 = vor.u32 %v1041, %v1042
      %v1044 = vshll.u32 920167782, %v1029
      %v1045 = vshrl.u32 1326507024, %v1030
      %v1046 = vor.u32 %v1044, %v1045
      %vm1047 = vcmp.lt.s32.totalorder %v1028, 1
      %vm1048 = vcmp.lt.s32.totalorder %v1028, 2
      %vm1049 = vcmp.lt.s32.totalorder %v1028, 3
      %vm1050 = vcmp.lt.s32.totalorder %v1028, 4
      %v1051 = vsel %vm1047, %v1031, %v1034
      %v1052 = vsel %vm1050, %v1040, 2102212464
      %v1053 = vsel %vm1049, %v1037, %v1052
      %v1054 = vsel %vm1048, %v1051, %v1053
      %v1055 = vsel %vm1047, %v1034, %v1037
      %v1056 = vsel %vm1050, %v1043, 920167782
      %v1057 = vsel %vm1049, %v1040, %v1056
      %v1058 = vsel %vm1048, %v1055, %v1057
      %v1059 = vsel %vm1047, %v1037, %v1040
      %v1060 = vsel %vm1050, %v1046, 1326507024
      %v1061 = vsel %vm1049, %v1043, %v1060
      %v1062 = vsel %vm1048, %v1059, %v1061
      %v1063 = vshll.u32 %v1023, 8
      %v1064 = vand.u32 %v1063, 65535
      %v1065 = vshrl.u32 %v1063, 16
      %v1066 = vand.u32 %v1062, 65535
      %v1067 = vshrl.u32 %v1062, 16
      %v1068 = vmul.u32 %v1064, %v1066
      %v1069 = vmul.u32 %v1064, %v1067
      %v1070 = vmul.u32 %v1065, %v1066
      %v1071 = vmul.u32 %v1065, %v1067
      %v1072 = vshll.u32 %v1069, 16
      %v1073 = vshrl.u32 %v1069, 16
      %v1074 = vshll.u32 %v1070, 16
      %v1075 = vshrl.u32 %v1070, 16
      %vm1076 = vc.u32 %v1068, %v1072
      %v1077 = vsel %vm1076, 1, 0
      %v1078 = vadd.s32 %v1068, %v1072
      %v1079 = vadd.s32 %v1071, %v1077
      %vm1080 = vc.u32 %v1078, %v1074
      %v1081 = vsel %vm1080, 1, 0
      %v1082 = vadd.s32 %v1078, %v1074
      %v1083 = vadd.s32 %v1079, %v1081
      %v1084 = vadd.s32 %v1083, %v1073
      %v1085 = vadd.s32 %v1084, %v1075
      %v1086 = vand.u32 %v1063, 65535
      %v1087 = vshrl.u32 %v1063, 16
      %v1088 = vand.u32 %v1058, 65535
      %v1089 = vshrl.u32 %v1058, 16
      %v1090 = vmul.u32 %v1086, %v1088
      %v1091 = vmul.u32 %v1086, %v1089
      %v1092 = vmul.u32 %v1087, %v1088
      %v1093 = vmul.u32 %v1087, %v1089
      %v1094 = vshll.u32 %v1091, 16
      %v1095 = vshrl.u32 %v1091, 16
      %v1096 = vshll.u32 %v1092, 16
      %v1097 = vshrl.u32 %v1092, 16
      %vm1098 = vc.u32 %v1090, %v1094
      %v1099 = vsel %vm1098, 1, 0
      %v1100 = vadd.s32 %v1090, %v1094
      %v1101 = vadd.s32 %v1093, %v1099
      %vm1102 = vc.u32 %v1100, %v1096
      %v1103 = vsel %vm1102, 1, 0
      %v1104 = vadd.s32 %v1100, %v1096
      %v1105 = vadd.s32 %v1101, %v1103
      %v1106 = vadd.s32 %v1105, %v1095
      %v1107 = vadd.s32 %v1106, %v1097
      %v1108 = vmul.u32 %v1063, %v1054
      %v1109 = vadd.s32 %v1085, %v1104
      %vm1110 = vc.u32 %v1085, %v1104
      %v1111 = vadd.s32 %v1107, 1
      %v1112 = vsel %vm1110, %v1111, %v1107
      %v1113 = vadd.s32 %v1108, %v1112
      %v1114 = vadd.s32 %v1113, 536870912
      %v1115 = vshrl.u32 %v1114, 30
      %v1116 = vshll.u32 %v1115, 30
      %v1117 = vsub.s32 %v1113, %v1116
      %vm1118 = vcmp.lt.s32.totalorder %v1117, 0
      %v1119 = vsub.s32 0, %v1117
      %v1120 = vsel %vm1118, %v1119, %v1117
      %v1121 = vclz %v1120
      %v1122 = vsub.s32 %v1121, 2
      %vm1123 = vcmp.gt.s32.totalorder 0, %v1122
      %v1124 = vsel %vm1123, 0, %v1122
      %v1125 = vsub.s32 32, %v1124
      %v1126 = vshll.u32 %v1117, %v1124
      %v1127 = vshrl.u32 %v1109, %v1125
      %v1128 = vor.u32 %v1126, %v1127
      %v1129 = vsub.s32 4294967266, %v1124
      %v1130 = vadd.s32 %v1129, 127
      %v1131 = vshll.u32 %v1130, 23
      %v1132 = vor.u32 4788187, %v1131
      %v1133 = vand.u32 2147483647, %v1132
      %v1135 = vcvt.s32.f32 %v1128
      %v1136 = vmul.f32 %v1135, %v1133
      %v1137 = vxor.u32 %v1136, 2147483648
      %v1138 = vsel %vm1017, %v1137, %v1136
      %v1139 = vsub.s32 4, %v1115
      %v1140 = vsel %vm1017, %v1139, %v1115
      %v1141 = vsel %vm1016, %v681, %v1138
      %v1142 = vsel %vm1016, 0, %v1140
      %v1143 = vmul.f32 %v1141, %v1141
      %v1144 = vmul.f32 %v1143, -0.001358992
      %v1145 = vadd.f32 %v1144, 0.041655596
      %v1146 = vmul.f32 %v1143, %v1145
      %v1147 = vadd.f32 %v1146, -0.4999988
      %v1148 = vmul.f32 %v1143, %v1147
      %v1149 = vadd.f32 1.0, %v1148
      %v1150 = vmul.f32 %v1141, %v1141
      %v1151 = vmul.f32 %v1150, -0.00019511016
      %v1152 = vadd.f32 %v1151, 0.008332121
      %v1153 = vmul.f32 %v1150, %v1152
      %v1154 = vadd.f32 %v1153, -0.16666654
      %v1155 = vmul.f32 %v1150, %v1154
      %v1156 = vadd.f32 %v1155, 1.0
      %v1157 = vmul.f32 %v1156, %v1141
      %vm1158 = vweird.f32 %v681
      %v1159 = vadd.s32 %v1142, 3
      %v1160 = vand.u32 %v1159, 3
      %vm1161 = vcmp.lt.s32.totalorder %v1160, 2
      %vm1162 = vcmp.eq.s32.totalorder %v1160, 0
      %v1163 = vxor.u32 %v1157, 2147483648
      %v1164 = vsel %vm1162, %v1149, %v1163
      %vm1165 = vcmp.eq.s32.totalorder %v1160, 2
      %v1166 = vxor.u32 %v1149, 2147483648
      %v1167 = vsel %vm1165, %v1166, %v1157
      %v1168 = vsel %vm1161, %v1164, %v1167
      %v1169 = vsel %vm1158, nan, %v1168
      %v1170 = vand.u32 2147483647, %v701
      %vm1171 = vcmp.le.f32.partialorder %v1170, 0.7853982
      %vm1172 = vcmp.lt.s32.totalorder %v701, 0
      %v1173 = vand.u32 %v701, 2139095040
      %v1174 = vshrl.u32 %v1173, 23
      %v1175 = vsub.s32 %v1174, 127
      %v1176 = vand.u32 2147483647, %v701
      %v1177 = vand.u32 %v1176, 8388607
      %v1178 = vor.u32 %v1177, 8388608
      %v1179 = vsub.s32 0, %v1178
      %v1180 = vadd.s32 %v1175, 1
      %vm1181 = vcmp.gt.s32.totalorder %v1180, 0
      %v1182 = vsel %vm1181, %v1180, 0
      %v1183 = vshrl.u32 %v1182, 5
      %v1184 = vand.u32 %v1182, 31
      %v1185 = vsub.s32 32, %v1184
      %v1186 = vshrl.u32 683565275, %v1185
      %v1187 = vshll.u32 683565275, %v1184
      %v1188 = vshrl.u32 2475754826, %v1185
      %v1189 = vor.u32 %v1187, %v1188
      %v1190 = vshll.u32 2475754826, %v1184
      %v1191 = vshrl.u32 2131351028, %v1185
      %v1192 = vor.u32 %v1190, %v1191
      %v1193 = vshll.u32 2131351028, %v1184
      %v1194 = vshrl.u32 2102212464, %v1185
      %v1195 = vor.u32 %v1193, %v1194
      %v1196 = vshll.u32 2102212464, %v1184
      %v1197 = vshrl.u32 920167782, %v1185
      %v1198 = vor.u32 %v1196, %v1197
      %v1199 = vshll.u32 920167782, %v1184
      %v1200 = vshrl.u32 1326507024, %v1185
      %v1201 = vor.u32 %v1199, %v1200
      %vm1202 = vcmp.lt.s32.totalorder %v1183, 1
      %vm1203 = vcmp.lt.s32.totalorder %v1183, 2
      %vm1204 = vcmp.lt.s32.totalorder %v1183, 3
      %vm1205 = vcmp.lt.s32.totalorder %v1183, 4
      %v1206 = vsel %vm1202, %v1186, %v1189
      %v1207 = vsel %vm1205, %v1195, 2102212464
      %v1208 = vsel %vm1204, %v1192, %v1207
      %v1209 = vsel %vm1203, %v1206, %v1208
      %v1210 = vsel %vm1202, %v1189, %v1192
      %v1211 = vsel %vm1205, %v1198, 920167782
      %v1212 = vsel %vm1204, %v1195, %v1211
      %v1213 = vsel %vm1203, %v1210, %v1212
      %v1214 = vsel %vm1202, %v1192, %v1195
      %v1215 = vsel %vm1205, %v1201, 1326507024
      %v1216 = vsel %vm1204, %v1198, %v1215
      %v1217 = vsel %vm1203, %v1214, %v1216
      %v1218 = vshll.u32 %v1178, 8
      %v1219 = vand.u32 %v1218, 65535
      %v1220 = vshrl.u32 %v1218, 16
      %v1221 = vand.u32 %v1217, 65535
      %v1222 = vshrl.u32 %v1217, 16
      %v1223 = vmul.u32 %v1219, %v1221
      %v1224 = vmul.u32 %v1219, %v1222
      %v1225 = vmul.u32 %v1220, %v1221
      %v1226 = vmul.u32 %v1220, %v1222
      %v1227 = vshll.u32 %v1224, 16
      %v1228 = vshrl.u32 %v1224, 16
      %v1229 = vshll.u32 %v1225, 16
      %v1230 = vshrl.u32 %v1225, 16
      %vm1231 = vc.u32 %v1223, %v1227
      %v1232 = vsel %vm1231, 1, 0
      %v1233 = vadd.s32 %v1223, %v1227
      %v1234 = vadd.s32 %v1226, %v1232
      %vm1235 = vc.u32 %v1233, %v1229
      %v1236 = vsel %vm1235, 1, 0
      %v1237 = vadd.s32 %v1233, %v1229
      %v1238 = vadd.s32 %v1234, %v1236
      %v1239 = vadd.s32 %v1238, %v1228
      %v1240 = vadd.s32 %v1239, %v1230
      %v1241 = vand.u32 %v1218, 65535
      %v1242 = vshrl.u32 %v1218, 16
      %v1243 = vand.u32 %v1213, 65535
      %v1244 = vshrl.u32 %v1213, 16
      %v1245 = vmul.u32 %v1241, %v1243
      %v1246 = vmul.u32 %v1241, %v1244
      %v1247 = vmul.u32 %v1242, %v1243
      %v1248 = vmul.u32 %v1242, %v1244
      %v1249 = vshll.u32 %v1246, 16
      %v1250 = vshrl.u32 %v1246, 16
      %v1251 = vshll.u32 %v1247, 16
      %v1252 = vshrl.u32 %v1247, 16
      %vm1253 = vc.u32 %v1245, %v1249
      %v1254 = vsel %vm1253, 1, 0
      %v1255 = vadd.s32 %v1245, %v1249
      %v1256 = vadd.s32 %v1248, %v1254
      %vm1257 = vc.u32 %v1255, %v1251
      %v1258 = vsel %vm1257, 1, 0
      %v1259 = vadd.s32 %v1255, %v1251
      %v1260 = vadd.s32 %v1256, %v1258
      %v1261 = vadd.s32 %v1260, %v1250
      %v1262 = vadd.s32 %v1261, %v1252
      %v1263 = vmul.u32 %v1218, %v1209
      %v1264 = vadd.s32 %v1240, %v1259
      %vm1265 = vc.u32 %v1240, %v1259
      %v1266 = vadd.s32 %v1262, 1
      %v1267 = vsel %vm1265, %v1266, %v1262
      %v1268 = vadd.s32 %v1263, %v1267
      %v1269 = vadd.s32 %v1268, 536870912
      %v1270 = vshrl.u32 %v1269, 30
      %v1271 = vshll.u32 %v1270, 30
      %v1272 = vsub.s32 %v1268, %v1271
      %vm1273 = vcmp.lt.s32.totalorder %v1272, 0
      %v1274 = vsub.s32 0, %v1272
      %v1275 = vsel %vm1273, %v1274, %v1272
      %v1276 = vclz %v1275
      %v1277 = vsub.s32 %v1276, 2
      %vm1278 = vcmp.gt.s32.totalorder 0, %v1277
      %v1279 = vsel %vm1278, 0, %v1277
      %v1280 = vsub.s32 32, %v1279
      %v1281 = vshll.u32 %v1272, %v1279
      %v1282 = vshrl.u32 %v1264, %v1280
      %v1283 = vor.u32 %v1281, %v1282
      %v1284 = vsub.s32 4294967266, %v1279
      %v1285 = vadd.s32 %v1284, 127
      %v1286 = vshll.u32 %v1285, 23
      %v1287 = vor.u32 4788187, %v1286
      %v1288 = vand.u32 2147483647, %v1287
      %v1290 = vcvt.s32.f32 %v1283
      %v1291 = vmul.f32 %v1290, %v1288
      %v1292 = vxor.u32 %v1291, 2147483648
      %v1293 = vsel %vm1172, %v1292, %v1291
      %v1294 = vsub.s32 4, %v1270
      %v1295 = vsel %vm1172, %v1294, %v1270
      %v1296 = vsel %vm1171, %v701, %v1293
      %v1297 = vsel %vm1171, 0, %v1295
      %v1298 = vmul.f32 %v1296, %v1296
      %v1299 = vmul.f32 %v1298, -0.001358992
      %v1300 = vadd.f32 %v1299, 0.041655596
      %v1301 = vmul.f32 %v1298, %v1300
      %v1302 = vadd.f32 %v1301, -0.4999988
      %v1303 = vmul.f32 %v1298, %v1302
      %v1304 = vadd.f32 1.0, %v1303
      %v1305 = vmul.f32 %v1296, %v1296
      %v1306 = vmul.f32 %v1305, -0.00019511016
      %v1307 = vadd.f32 %v1306, 0.008332121
      %v1308 = vmul.f32 %v1305, %v1307
      %v1309 = vadd.f32 %v1308, -0.16666654
      %v1310 = vmul.f32 %v1305, %v1309
      %v1311 = vadd.f32 %v1310, 1.0
      %v1312 = vmul.f32 %v1311, %v1296
      %vm1313 = vweird.f32 %v701
      %v1314 = vadd.s32 %v1297, 3
      %v1315 = vand.u32 %v1314, 3
      %vm1316 = vcmp.lt.s32.totalorder %v1315, 2
      %vm1317 = vcmp.eq.s32.totalorder %v1315, 0
      %v1318 = vxor.u32 %v1312, 2147483648
      %v1319 = vsel %vm1317, %v1304, %v1318
      %vm1320 = vcmp.eq.s32.totalorder %v1315, 2
      %v1321 = vxor.u32 %v1304, 2147483648
      %v1322 = vsel %vm1320, %v1321, %v1312
      %v1323 = vsel %vm1316, %v1319, %v1322
      %v1324 = vsel %vm1313, nan, %v1323
      %v1325 = vmul.f32 %v575, %v1169
      %v1326 = vmul.f32 %v595, %v1324
      %1327 = vst [vmem:[%s484] sm:$0xff] %v1325
      %1328 = vst [vmem:[%s484 + $0x8] sm:$0xff] %v1326
      %s1329 = smul.u32 2, %s28
      %p1330 = scmp.lt.s32.totalorder %s27, 1
      %s1331 = scalar_select %p1330, %s27, 1
      %p1332 = scmp.lt.s32.totalorder %s1329, 1
      %s1333 = scalar_select %p1332, %s1329, 1
      %s1334 = smul.addr %s1331, 2
      %s1335 = sadd.s32 %s1333, %s1334
      %s1336 = smul.addr %s1335, 8
      %s1337 = scalar_lea.vmem %s10, %s1336
      %s1338 = smul.u32 2, %s28
      %p1339 = scmp.lt.s32.totalorder %s27, 1
      %s1340 = scalar_select %p1339, %s27, 1
      %p1341 = scmp.lt.s32.totalorder %s1338, 1
      %s1342 = scalar_select %p1341, %s1338, 1
      %s1343 = smul.addr %s1340, 2
      %s1344 = sadd.s32 %s1342, %s1343
      %s1345 = smul.addr %s1344, 8
      %s1346 = scalar_lea.vmem %s11, %s1345
      // Predicated region
      $region61: #{frescat_area_forward.2} parent=59 // pred_check
        %p1347 = pneg %p279
      $region62: #{frescat_area_forward.2} parent=59 // pred_check_branch
        %1349 = sbr.rel (%p1347) target = $region64
      $region63: #{frescat_area_forward.2} parent=59 // pred_region
        %s1350 = smul.u32 2, %s28
      $region64: #{frescat_area_forward.2} parent=59 // pred_fallthru
        _
      // Predicated region
      $region65: #{frescat_area_forward.2} parent=59 // pred_check
        %p1351 = pneg %p307
      $region66: #{frescat_area_forward.2} parent=59 // pred_check_branch
        %1353 = sbr.rel (%p1351) target = $region68
      $region67: #{frescat_area_forward.2} parent=59 // pred_region
        %s1354 = smul.u32 2, %s28
      $region68: #{frescat_area_forward.2} parent=59 // pred_fallthru
        _
    $region60: #{frescat_area_forward.2} parent=5 // pred_fallthru
      _
    %p1355 = scmp.le.s32.totalorder 2, %s18
    // Predicated region
    $region69: #{frescat_area_forward.2} parent=5 // pred_check
      %p1356 = pneg %p1355
    $region70: #{frescat_area_forward.2} parent=5 // pred_check_branch
      %1358 = sbr.rel (%p1356) target = $region72
    $region71: #{frescat_area_forward.2} parent=5 // pred_region
      %s1359 = ssub.s32 %s18, 2
      // Predicated region
      $region73: #{frescat_area_forward.2} parent=71 // pred_check
        %p1360 = pneg %p285
      $region74: #{frescat_area_forward.2} parent=71 // pred_check_branch
        %1362 = sbr.rel (%p1360) target = $region76
      $region75: #{frescat_area_forward.2} parent=71 // pred_region
        %s1363 = smul.u32 2, %s30
        %p1364 = scmp.lt.s32.totalorder %s29, 1
        %s1365 = scalar_select %p1364, %s29, 1
        %p1366 = scmp.lt.s32.totalorder %s1363, 1
        %s1367 = scalar_select %p1366, %s1363, 1
        %s1368 = smul.addr %s1365, 2
        %s1369 = sadd.s32 %s1367, %s1368
        %s1370 = smul.addr %s1369, 8
        %s1371 = scalar_lea.vmem %s10, %s1370
      $region76: #{frescat_area_forward.2} parent=71 // pred_fallthru
        _
      // Predicated region
      $region77: #{frescat_area_forward.2} parent=71 // pred_check
        %p1372 = pneg %p313
      $region78: #{frescat_area_forward.2} parent=71 // pred_check_branch
        %1374 = sbr.rel (%p1372) target = $region80
      $region79: #{frescat_area_forward.2} parent=71 // pred_region
        %s1375 = smul.u32 2, %s30
        %p1376 = scmp.lt.s32.totalorder %s29, 1
        %s1377 = scalar_select %p1376, %s29, 1
        %p1378 = scmp.lt.s32.totalorder %s1375, 1
        %s1379 = scalar_select %p1378, %s1375, 1
        %s1380 = smul.addr %s1377, 2
        %s1381 = sadd.s32 %s1379, %s1380
        %s1382 = smul.addr %s1381, 8
        %s1383 = scalar_lea.vmem %s11, %s1382
      $region80: #{frescat_area_forward.2} parent=71 // pred_fallthru
        _
    $region72: #{frescat_area_forward.2} parent=5 // pred_fallthru
      _
  $region6: #{frescat_area_forward.2} parent=0 // loop_footer
    %s22 = sadd.s32 1, %s18
  $region7: #{frescat_area_forward.2} parent=0 // loop_footer_branch
    %17 = sbr.rel target = $region3
  $region8: #{frescat_area_forward.2} parent=0 // loop_exit
    _

// kernel: frescat_area_forward.3
$region0: #{frescat_area_forward.3}
  #allocation0 [shape = 'u32[]', space=smem, size = 0x4, offset = 0x4, fixed_abs, tag = 'smem constant byte address 0x4 - core index']
  #allocation1 [shape = 'u32[72,128]{1,0:T(1,128)}', space=vmem, size = 0x9000, scoped, tag = 'internal scratch']
  %s0 = inlined_call_operand.vmem [shape: f32[2,72,256], index: 0, kind: input, shape index: {}]
  %s1 = inlined_call_operand.vmem [shape: f32[2,8,256], index: 1, kind: input, shape index: {}]
  %s2 = inlined_call_operand.vmem [shape: f32[32,72], index: 2, kind: input, shape index: {}]
  %s3 = inlined_call_operand.vmem [shape: f32[32,8], index: 3, kind: input, shape index: {}]
  %s4 = inlined_call_operand.vmem [shape: f32[32,1], index: 4, kind: input, shape index: {}]
  %s5 = inlined_call_operand.vmem [shape: f32[2,32,256], index: 5, kind: output, shape index: {}]
  %s6 = sld [smem:[#allocation0]]
  $region53: #{frescat_area_forward.3} parent=0
    _
  %s8 = ssub.s32 1, %s6
  %s9 = scalar_select 0, %s8, %s6
  loop: start=0, step=1, limit=4
  $region2: #{frescat_area_forward.3} parent=0 // loop_pre_header
    _
  $region3: #{frescat_area_forward.3} parent=0 // loop_header
    %s11 = sphi 0, %s15
    %p12 = scmp.ge.s32.totalorder %s11, 4
    %s18 = sphi 0, %s30
    %s19 = sphi 0, %s26
    %s20 = sphi 0, %s18
    %s21 = sphi 0, %s19
    %s22 = sphi 0, %s20
    %s23 = sphi 0, %s21
    %s35 = sphi 0, %s37
    %s38 = sphi 0, %s35
    %s39 = sphi 0, %s38
    %s55 = sphi 0, %s39
    %s63 = sphi 0, %s65
    %s66 = sphi 0, %s63
    %s67 = sphi 0, %s66
    %s83 = sphi 0, %s67
    %s87 = sphi 0, %s87
    %s89 = sphi 0, %s87
    %s90 = sphi 0, %s89
    %s104 = sphi 0, %s90
    %s108 = sphi 0, %s108
    %s110 = sphi 0, %s108
    %s111 = sphi 0, %s110
    %s125 = sphi 0, %s111
    %s129 = sphi 0, %s129
    %s131 = sphi 0, %s129
    %s132 = sphi 0, %s131
    %s146 = sphi 0, %s132
    %s154 = sphi 0, %s156
    %s157 = sphi 0, %s154
    %s158 = sphi 0, %s157
    %s174 = sphi 0, %s158
  $region4: #{frescat_area_forward.3} parent=0 // loop_header_branch
    %14 = sbr.rel (%p12) target = $region8
  $region5: #{frescat_area_forward.3} parent=0 // loop_body
    %s16 = ssub.s32 %s11, 1
    %s17 = ssub.s32 %s11, 2
    %s24 = sadd.s32 1, %s19
    %p25 = scmp.ge.s32.totalorder %s24, 1
    %s26 = scalar_select %p25, 0, %s24
    %s27 = sadd.s32 1, %s18
    %s28 = scalar_select %p25, %s27, %s18
    %p29 = scmp.ge.s32.totalorder %s28, 2
    %s30 = scalar_select %p29, 0, %s28
    %s31 = ssub.s32 %s18, %s30
    %s32 = ssub.s32 %s19, %s26
    %s33 = sor.u32 %s31, %s32
    %p34 = scmp.eq.s32.totalorder %s33, 0
    %s36 = sadd.s32 %s35, 1
    %s37 = scalar_select %p34, %s35, %s36
    %p40 = pneg %p34
    %p41 = scmp.eq.s32.totalorder %s11, 1
    %p42 = por %p40, %p41
    %p43 = scmp.ne.s32.totalorder %s35, %s38
    %p44 = scmp.eq.s32.totalorder %s11, 0
    %p45 = por %p43, %p44
    %p46 = scmp.ne.s32.totalorder %s35, %s38
    %p47 = scmp.eq.s32.totalorder %s16, 1
    %p48 = por %p46, %p47
    %p49 = scmp.ne.s32.totalorder %s38, %s39
    %p50 = scmp.eq.s32.totalorder %s16, 0
    %p51 = por %p49, %p50
    %p52 = scmp.ne.s32.totalorder %s38, %s39
    %p53 = scmp.eq.s32.totalorder %s17, 1
    %p54 = por %p52, %p53
    %p56 = scmp.ne.s32.totalorder %s39, %s55
    %p57 = scmp.eq.s32.totalorder %s17, 0
    %p58 = por %p56, %p57
    %s59 = ssub.s32 %s18, %s30
    %s60 = ssub.s32 %s19, %s26
    %s61 = sor.u32 %s59, %s60
    %p62 = scmp.eq.s32.totalorder %s61, 0
    %s64 = sadd.s32 %s63, 1
    %s65 = scalar_select %p62, %s63, %s64
    %p68 = pneg %p62
    %p69 = scmp.eq.s32.totalorder %s11, 1
    %p70 = por %p68, %p69
    %p71 = scmp.ne.s32.totalorder %s63, %s66
    %p72 = scmp.eq.s32.totalorder %s11, 0
    %p73 = por %p71, %p72
    %p74 = scmp.ne.s32.totalorder %s63, %s66
    %p75 = scmp.eq.s32.totalorder %s16, 1
    %p76 = por %p74, %p75
    %p77 = scmp.ne.s32.totalorder %s66, %s67
    %p78 = scmp.eq.s32.totalorder %s16, 0
    %p79 = por %p77, %p78
    %p80 = scmp.ne.s32.totalorder %s66, %s67
    %p81 = scmp.eq.s32.totalorder %s17, 1
    %p82 = por %p80, %p81
    %p84 = scmp.ne.s32.totalorder %s67, %s83
    %p85 = scmp.eq.s32.totalorder %s17, 0
    %p86 = por %p84, %p85
    %s88 = sadd.s32 %s87, 1
    %p91 = scmp.eq.s32.totalorder %s11, 1
    %p92 = scmp.ne.s32.totalorder %s87, %s89
    %p93 = scmp.eq.s32.totalorder %s11, 0
    %p94 = por %p92, %p93
    %p95 = scmp.ne.s32.totalorder %s87, %s89
    %p96 = scmp.eq.s32.totalorder %s16, 1
    %p97 = por %p95, %p96
    %p98 = scmp.ne.s32.totalorder %s89, %s90
    %p99 = scmp.eq.s32.totalorder %s16, 0
    %p100 = por %p98, %p99
    %p101 = scmp.ne.s32.totalorder %s89, %s90
    %p102 = scmp.eq.s32.totalorder %s17, 1
    %p103 = por %p101, %p102
    %p105 = scmp.ne.s32.totalorder %s90, %s104
    %p106 = scmp.eq.s32.totalorder %s17, 0
    %p107 = por %p105, %p106
    %s109 = sadd.s32 %s108, 1
    %p112 = scmp.eq.s32.totalorder %s11, 1
    %p113 = scmp.ne.s32.totalorder %s108, %s110
    %p114 = scmp.eq.s32.totalorder %s11, 0
    %p115 = por %p113, %p114
    %p116 = scmp.ne.s32.totalorder %s108, %s110
    %p117 = scmp.eq.s32.totalorder %s16, 1
    %p118 = por %p116, %p117
    %p119 = scmp.ne.s32.totalorder %s110, %s111
    %p120 = scmp.eq.s32.totalorder %s16, 0
    %p121 = por %p119, %p120
    %p122 = scmp.ne.s32.totalorder %s110, %s111
    %p123 = scmp.eq.s32.totalorder %s17, 1
    %p124 = por %p122, %p123
    %p126 = scmp.ne.s32.totalorder %s111, %s125
    %p127 = scmp.eq.s32.totalorder %s17, 0
    %p128 = por %p126, %p127
    %s130 = sadd.s32 %s129, 1
    %p133 = scmp.eq.s32.totalorder %s11, 1
    %p134 = scmp.ne.s32.totalorder %s129, %s131
    %p135 = scmp.eq.s32.totalorder %s11, 0
    %p136 = por %p134, %p135
    %p137 = scmp.ne.s32.totalorder %s129, %s131
    %p138 = scmp.eq.s32.totalorder %s16, 1
    %p139 = por %p137, %p138
    %p140 = scmp.ne.s32.totalorder %s131, %s132
    %p141 = scmp.eq.s32.totalorder %s16, 0
    %p142 = por %p140, %p141
    %p143 = scmp.ne.s32.totalorder %s131, %s132
    %p144 = scmp.eq.s32.totalorder %s17, 1
    %p145 = por %p143, %p144
    %p147 = scmp.ne.s32.totalorder %s132, %s146
    %p148 = scmp.eq.s32.totalorder %s17, 0
    %p149 = por %p147, %p148
    %s150 = ssub.s32 %s18, %s30
    %s151 = ssub.s32 %s19, %s26
    %s152 = sor.u32 %s150, %s151
    %p153 = scmp.eq.s32.totalorder %s152, 0
    %s155 = sadd.s32 %s154, 1
    %s156 = scalar_select %p153, %s154, %s155
    %p159 = pneg %p153
    %p160 = scmp.eq.s32.totalorder %s11, 1
    %p161 = por %p159, %p160
    %p162 = scmp.ne.s32.totalorder %s154, %s157
    %p163 = scmp.eq.s32.totalorder %s11, 0
    %p164 = por %p162, %p163
    %p165 = scmp.ne.s32.totalorder %s154, %s157
    %p166 = scmp.eq.s32.totalorder %s16, 1
    %p167 = por %p165, %p166
    %p168 = scmp.ne.s32.totalorder %s157, %s158
    %p169 = scmp.eq.s32.totalorder %s16, 0
    %p170 = por %p168, %p169
    %p171 = scmp.ne.s32.totalorder %s157, %s158
    %p172 = scmp.eq.s32.totalorder %s17, 1
    %p173 = por %p171, %p172
    %p175 = scmp.ne.s32.totalorder %s158, %s174
    %p176 = scmp.eq.s32.totalorder %s17, 0
    %p177 = por %p175, %p176
    %p178 = scmp.le.s32.totalorder 1, %s11
    %p179 = scmp.lt.s32.totalorder %s11, 3
    %p180 = pnand %p178, %p179
    %p181 = pneg %p180
    // Predicated region
    $region9: #{frescat_area_forward.3} parent=5 // pred_check
      _
    $region10: #{frescat_area_forward.3} parent=5 // pred_check_branch
      %183 = sbr.rel (%p180) target = $region12
    $region11: #{frescat_area_forward.3} parent=5 // pred_region
      %s184 = ssub.s32 %s11, 1
      // Predicated region
      $region13: #{frescat_area_forward.3} parent=11 // pred_check
        %p185 = pneg %p100
      $region14: #{frescat_area_forward.3} parent=11 // pred_check_branch
        %187 = sbr.rel (%p185) target = $region16
      $region15: #{frescat_area_forward.3} parent=11 // pred_region
        _
      $region16: #{frescat_area_forward.3} parent=11 // pred_fallthru
        _
      // Predicated region
      $region17: #{frescat_area_forward.3} parent=11 // pred_check
        %p188 = pneg %p121
      $region18: #{frescat_area_forward.3} parent=11 // pred_check_branch
        %190 = sbr.rel (%p188) target = $region20
      $region19: #{frescat_area_forward.3} parent=11 // pred_region
        _
      $region20: #{frescat_area_forward.3} parent=11 // pred_fallthru
        _
      // Predicated region
      $region21: #{frescat_area_forward.3} parent=11 // pred_check
        %p191 = pneg %p142
      $region22: #{frescat_area_forward.3} parent=11 // pred_check_branch
        %193 = sbr.rel (%p191) target = $region24
      $region23: #{frescat_area_forward.3} parent=11 // pred_region
        _
      $region24: #{frescat_area_forward.3} parent=11 // pred_fallthru
        _
    $region12: #{frescat_area_forward.3} parent=5 // pred_fallthru
      _
    %p194 = scmp.lt.s32.totalorder %s11, 2
    // Predicated region
    $region25: #{frescat_area_forward.3} parent=5 // pred_check
      %p195 = pneg %p194
    $region26: #{frescat_area_forward.3} parent=5 // pred_check_branch
      %197 = sbr.rel (%p195) target = $region28
    $region27: #{frescat_area_forward.3} parent=5 // pred_region
      // Predicated region
      $region29: #{frescat_area_forward.3} parent=27 // pred_check
        %p198 = pneg %p45
      $region30: #{frescat_area_forward.3} parent=27 // pred_check_branch
        %200 = sbr.rel (%p198) target = $region32
      $region31: #{frescat_area_forward.3} parent=27 // pred_region
        %s201 = smul.u32 2, %s19
        %p202 = scmp.lt.s32.totalorder %s18, 1
        %s203 = scalar_select %p202, %s18, 1
        %p204 = scmp.lt.s32.totalorder %s201, 1
        %s205 = scalar_select %p204, %s201, 1
        %s206 = smul.addr %s203, 18
        %s207 = sadd.s32 %s205, %s206
        %s208 = smul.addr %s207, 8
        %s209 = scalar_lea.vmem %s0, %s208
        %s210 = smul.u32 2, %s19
      $region32: #{frescat_area_forward.3} parent=27 // pred_fallthru
        _
      // Predicated region
      $region33: #{frescat_area_forward.3} parent=27 // pred_check
        %p211 = pneg %p73
      $region34: #{frescat_area_forward.3} parent=27 // pred_check_branch
        %213 = sbr.rel (%p211) target = $region36
      $region35: #{frescat_area_forward.3} parent=27 // pred_region
        %s214 = smul.u32 2, %s19
        %p215 = scmp.lt.s32.totalorder %s18, 1
        %s216 = scalar_select %p215, %s18, 1
        %p217 = scmp.lt.s32.totalorder %s214, 1
        %s218 = scalar_select %p217, %s214, 1
        %s219 = smul.addr %s216, 2
        %s220 = sadd.s32 %s218, %s219
        %s221 = smul.addr %s220, 8
        %s222 = scalar_lea.vmem %s1, %s221
        %s223 = smul.u32 2, %s19
      $region36: #{frescat_area_forward.3} parent=27 // pred_fallthru
        _
    $region28: #{frescat_area_forward.3} parent=5 // pred_fallthru
      _
    %p224 = scmp.le.s32.totalorder 1, %s11
    %p225 = scmp.lt.s32.totalorder %s11, 3
    %p226 = pnand %p224, %p225
    %p227 = pneg %p226
    // Predicated region
    $region37: #{frescat_area_forward.3} parent=5 // pred_check
      _
    $region38: #{frescat_area_forward.3} parent=5 // pred_check_branch
      %229 = sbr.rel (%p226) target = $region40
    $region39: #{frescat_area_forward.3} parent=5 // pred_region
      %s230 = ssub.s32 %s11, 1
      %s231 = smul.u32 2, %s21
      %p232 = scmp.lt.s32.totalorder %s20, 1
      %s233 = scalar_select %p232, %s20, 1
      %p234 = scmp.lt.s32.totalorder %s231, 1
      %s235 = scalar_select %p234, %s231, 1
      %s236 = smul.addr %s233, 18
      %s237 = sadd.s32 %s235, %s236
      %s238 = smul.addr %s237, 8
      %s239 = scalar_lea.vmem %s0, %s238
      %p240 = pneg %p51
      %p241 = pneg %p48
      %s242 = smul.u32 2, %s21
      %p243 = scmp.lt.s32.totalorder %s20, 1
      %s244 = scalar_select %p243, %s20, 1
      %p245 = scmp.lt.s32.totalorder %s242, 1
      %s246 = scalar_select %p245, %s242, 1
      %s247 = smul.addr %s244, 2
      %s248 = sadd.s32 %s246, %s247
      %s249 = smul.addr %s248, 8
      %s250 = scalar_lea.vmem %s1, %s249
      %p251 = pneg %p79
      %p252 = pneg %p76
      %p253 = pneg %p100
      %p254 = pneg %p97
      %p255 = pneg %p121
      %p256 = pneg %p118
      %p257 = pneg %p142
      %p258 = pneg %p139
      %p259 = pneg %p170
      %p260 = pneg %p167
      %s261 = smul.u32 2, %s21
      %p262 = scmp.lt.s32.totalorder %s20, 1
      %s263 = scalar_select %p262, %s20, 1
      %p264 = scmp.lt.s32.totalorder %s261, 1
      %s265 = scalar_select %p264, %s261, 1
      %s266 = smul.addr %s263, 8
      %s267 = sadd.s32 %s265, %s266
      %s268 = smul.addr %s267, 8
      %s269 = scalar_lea.vmem %s5, %s268
      %s270 = smul.u32 2, %s21
      %p271 = scmp.lt.s32.totalorder %s20, 1
      %s272 = scalar_select %p271, %s20, 1
      %p273 = scmp.lt.s32.totalorder %s270, 1
      %s274 = scalar_select %p273, %s270, 1
      %s275 = smul.addr %s272, 18
      %s276 = sadd.s32 %s274, %s275
      %s277 = smul.addr %s276, 8
      %s278 = scalar_lea.vmem %s0, %s277
      %s279 = smul.u32 2, %s21
      %s280 = smul.u32 2, %s21
      %p281 = scmp.lt.s32.totalorder %s20, 1
      %s282 = scalar_select %p281, %s20, 1
      %p283 = scmp.lt.s32.totalorder %s280, 1
      %s284 = scalar_select %p283, %s280, 1
      %s285 = smul.addr %s282, 2
      %s286 = sadd.s32 %s284, %s285
      %s287 = smul.addr %s286, 8
      %s288 = scalar_lea.vmem %s1, %s287
      %s289 = smul.u32 2, %s21
      %s290 = smul.u32 2, %s21
      %p291 = scmp.lt.s32.totalorder %s20, 1
      %s292 = scalar_select %p291, %s20, 1
      %p293 = scmp.lt.s32.totalorder %s290, 1
      %s294 = scalar_select %p293, %s290, 1
      %s295 = smul.addr %s292, 8
      %s296 = sadd.s32 %s294, %s295
      %s297 = smul.addr %s296, 8
      %s298 = scalar_lea.vmem %s5, %s297
      %s299 = smul.u32 2, %s21
      %v300 = vld [vmem:[%s2] sm:$0xff]
      %v301 = vld [vmem:[%s2 + $0x8] sm:$0xff]
      %v302 = vld [vmem:[%s2 + $0x10] sm:$0xff]
      %v303 = vld [vmem:[%s2 + $0x18] sm:$0xff]
      %v304 = vld [vmem:[%s278] sm:$0xff]
      %v305 = vld [vmem:[%s278 + $0x8] sm:$0xff]
      %v306 = vld [vmem:[%s278 + $0x10] sm:$0xff]
      %v307 = vld [vmem:[%s278 + $0x18] sm:$0xff]
      %v308 = vld [vmem:[%s278 + $0x20] sm:$0xff]
      %v309 = vld [vmem:[%s278 + $0x28] sm:$0xff]
      %v310 = vld [vmem:[%s278 + $0x30] sm:$0xff]
      %v311 = vld [vmem:[%s278 + $0x38] sm:$0xff]
      %v312 = vld [vmem:[%s278 + $0x40] sm:$0xff]
      %v313 = vld [vmem:[%s278 + $0x48] sm:$0xff]
      %v314 = vld [vmem:[%s278 + $0x50] sm:$0xff]
      %v315 = vld [vmem:[%s278 + $0x58] sm:$0xff]
      %v316 = vld [vmem:[%s278 + $0x60] sm:$0xff]
      %v317 = vld [vmem:[%s278 + $0x68] sm:$0xff]
      %v318 = vld [vmem:[%s278 + $0x70] sm:$0xff]
      %v319 = vld [vmem:[%s278 + $0x78] sm:$0xff]
      %v320 = vld [vmem:[%s278 + $0x80] sm:$0xff]
      %v321 = vld [vmem:[%s278 + $0x88] sm:$0xff]
      %v322 = vld [vmem:[%s3] sm:$0xff]
      %v323 = vld [vmem:[%s3 + $0x8] sm:$0xff]
      %v324 = vld [vmem:[%s3 + $0x10] sm:$0xff]
      %v325 = vld [vmem:[%s3 + $0x18] sm:$0xff]
      %v326 = vld [vmem:[%s288] sm:$0xff]
      %v327 = vld [vmem:[%s288 + $0x8] sm:$0xff]
      %vm328 = vcmask 64512
      %v330 = vsel %vm328, %v322, 0
      %v333 = vsel %vm328, %v323, 0
      %v336 = vsel %vm328, %v324, 0
      %v339 = vsel %vm328, %v325, 0
      %341 = vmatpush.msra.mxu0 0.0
      %342 = vmatpush.msra.mxu0 0.0
      %343 = vmatpush.msra.mxu0 0.0
      %344 = vmatpush.msra.mxu0 0.0
      %345 = vmatpush.msra.mxu0 0.0
      %346 = vmatpush.msra.mxu0 0.0
      %347 = vmatpush.msra.mxu0 0.0
      %348 = vmatpush.msra.mxu0 0.0
      %349 = vmatpush.msra.mxu0 0.0
      %350 = vmatpush.msra.mxu0 0.0
      %351 = vmatpush.msra.mxu0 0.0
      %352 = vmatpush.msra.mxu0 0.0
      %353 = vmatpush.msra.mxu0 0.0
      %354 = vmatpush.msra.mxu0 0.0
      %355 = vmatpush.msra.mxu0 0.0
      %356 = vmatpush.msra.mxu0 %v326
      %357 = vmatmul.f32.gmra.mxu0 %v330
      %v358 = vpop.f32.mrf.mxu0
      %v359 = vadd.f32 0.0, %v358
      %360 = vmatmul.f32.gmra.mxu0 %v333
      %v361 = vpop.f32.mrf.mxu0
      %v362 = vadd.f32 0.0, %v361
      %363 = vmatmul.f32.gmra.mxu0 %v336
      %v364 = vpop.f32.mrf.mxu0
      %v365 = vadd.f32 0.0, %v364
      %366 = vmatmul.f32.gmra.mxu0 %v339
      %v367 = vpop.f32.mrf.mxu0
      %v368 = vadd.f32 0.0, %v367
      %369 = vdwg.mxu0
      %370 = vmatpush.msra.mxu0 0.0
      %371 = vmatpush.msra.mxu0 0.0
      %372 = vmatpush.msra.mxu0 0.0
      %373 = vmatpush.msra.mxu0 0.0
      %374 = vmatpush.msra.mxu0 0.0
      %375 = vmatpush.msra.mxu0 0.0
      %376 = vmatpush.msra.mxu0 0.0
      %377 = vmatpush.msra.mxu0 0.0
      %378 = vmatpush.msra.mxu0 0.0
      %379 = vmatpush.msra.mxu0 0.0
      %380 = vmatpush.msra.mxu0 0.0
      %381 = vmatpush.msra.mxu0 0.0
      %382 = vmatpush.msra.mxu0 0.0
      %383 = vmatpush.msra.mxu0 0.0
      %384 = vmatpush.msra.mxu0 0.0
      %385 = vmatpush.msra.mxu0 %v327
      %386 = vmatmul.f32.gmra.mxu0 %v330
      %v387 = vpop.f32.mrf.mxu0
      %v388 = vadd.f32 0.0, %v387
      %389 = vmatmul.f32.gmra.mxu0 %v333
      %v390 = vpop.f32.mrf.mxu0
      %v391 = vadd.f32 0.0, %v390
      %392 = vmatmul.f32.gmra.mxu0 %v336
      %v393 = vpop.f32.mrf.mxu0
      %v394 = vadd.f32 0.0, %v393
      %395 = vmatmul.f32.gmra.mxu0 %v339
      %v396 = vpop.f32.mrf.mxu0
      %v397 = vadd.f32 0.0, %v396
      %398 = vdwg.mxu0
      %vm399 = vcmask 588800
      %v401 = vsel %vm399, %v300, 0
      %v404 = vsel %vm399, %v301, 0
      %v407 = vsel %vm399, %v302, 0
      %v410 = vsel %vm399, %v303, 0
      %412 = vmatpush.msra.mxu0 0.0
      %413 = vmatpush.msra.mxu0 0.0
      %414 = vmatpush.msra.mxu0 0.0
      %415 = vmatpush.msra.mxu0 0.0
      %416 = vmatpush.msra.mxu0 0.0
      %417 = vmatpush.msra.mxu0 0.0
      %418 = vmatpush.msra.mxu0 0.0
      %419 = vmatpush.msra.mxu0 %v320
      %420 = vmatpush.msra.mxu0 %v318
      %421 = vmatpush.msra.mxu0 %v316
      %422 = vmatpush.msra.mxu0 %v314
      %423 = vmatpush.msra.mxu0 %v312
      %424 = vmatpush.msra.mxu0 %v310
      %425 = vmatpush.msra.mxu0 %v308
      %426 = vmatpush.msra.mxu0 %v306
      %427 = vmatpush.msra.mxu0 %v304
      %428 = vmatmul.f32.gmra.mxu0 %v401
      %v429 = vpop.f32.mrf.mxu0
      %v430 = vadd.f32 %v359, %v429
      %431 = vmatmul.f32.gmra.mxu0 %v404
      %v432 = vpop.f32.mrf.mxu0
      %v433 = vadd.f32 %v362, %v432
      %434 = vmatmul.f32.gmra.mxu0 %v407
      %v435 = vpop.f32.mrf.mxu0
      %v436 = vadd.f32 %v365, %v435
      %437 = vmatmul.f32.gmra.mxu0 %v410
      %v438 = vpop.f32.mrf.mxu0
      %v439 = vadd.f32 %v368, %v438
      %440 = vdwg.mxu0
      %441 = vmatpush.msra.mxu0 0.0
      %442 = vmatpush.msra.mxu0 0.0
      %443 = vmatpush.msra.mxu0 0.0
      %444 = vmatpush.msra.mxu0 0.0
      %445 = vmatpush.msra.mxu0 0.0
      %446 = vmatpush.msra.mxu0 0.0
      %447 = vmatpush.msra.mxu0 0.0
      %448 = vmatpush.msra.mxu0 %v321
      %449 = vmatpush.msra.mxu0 %v319
      %450 = vmatpush.msra.mxu0 %v317
      %451 = vmatpush.msra.mxu0 %v315
      %452 = vmatpush.msra.mxu0 %v313
      %453 = vmatpush.msra.mxu0 %v311
      %454 = vmatpush.msra.mxu0 %v309
      %455 = vmatpush.msra.mxu0 %v307
      %456 = vmatpush.msra.mxu0 %v305
      %457 = vmatmul.f32.gmra.mxu0 %v401
      %v458 = vpop.f32.mrf.mxu0
      %v459 = vadd.f32 %v388, %v458
      %460 = vmatmul.f32.gmra.mxu0 %v404
      %v461 = vpop.f32.mrf.mxu0
      %v462 = vadd.f32 %v391, %v461
      %463 = vmatmul.f32.gmra.mxu0 %v407
      %v464 = vpop.f32.mrf.mxu0
      %v465 = vadd.f32 %v394, %v464
      %466 = vmatmul.f32.gmra.mxu0 %v410
      %v467 = vpop.f32.mrf.mxu0
      %v468 = vadd.f32 %v397, %v467
      %469 = vdwg.mxu0
      %v470 = vld [vmem:[%s4] sm:$0xff]
      %v471 = vld [vmem:[%s4 + $0x8] sm:$0xff]
      %v472 = vld [vmem:[%s4 + $0x10] sm:$0xff]
      %v473 = vld [vmem:[%s4 + $0x18] sm:$0xff]
      %475 = vset.pattern.permute.xlu0 0
      %476 = vperm.xlu0 %475, %v470
      %v477 = vpop.permute.xlu0 %476
      %480 = vset.pattern.permute.xlu0 0
      %481 = vperm.xlu0 %480, %v471
      %v482 = vpop.permute.xlu0 %481
      %485 = vset.pattern.permute.xlu0 0
      %486 = vperm.xlu0 %485, %v472
      %v487 = vpop.permute.xlu0 %486
      %490 = vset.pattern.permute.xlu0 0
      %491 = vperm.xlu0 %490, %v473
      %v492 = vpop.permute.xlu0 %491
      %v494 = vadd.f32 %v430, %v477
      %v495 = vadd.f32 %v459, %v477
      %v496 = vadd.f32 %v433, %v482
      %v497 = vadd.f32 %v462, %v482
      %v498 = vadd.f32 %v436, %v487
      %v499 = vadd.f32 %v465, %v487
      %v500 = vadd.f32 %v439, %v492
      %v501 = vadd.f32 %v468, %v492
      %502 = vst [vmem:[%s298] sm:$0xff] %v494
      %503 = vst [vmem:[%s298 + $0x8] sm:$0xff] %v495
      %504 = vst [vmem:[%s298 + $0x10] sm:$0xff] %v496
      %505 = vst [vmem:[%s298 + $0x18] sm:$0xff] %v497
      %506 = vst [vmem:[%s298 + $0x20] sm:$0xff] %v498
      %507 = vst [vmem:[%s298 + $0x28] sm:$0xff] %v499
      %508 = vst [vmem:[%s298 + $0x30] sm:$0xff] %v500
      %509 = vst [vmem:[%s298 + $0x38] sm:$0xff] %v501
      %s510 = smul.u32 2, %s21
      %p511 = scmp.lt.s32.totalorder %s20, 1
      %s512 = scalar_select %p511, %s20, 1
      %p513 = scmp.lt.s32.totalorder %s510, 1
      %s514 = scalar_select %p513, %s510, 1
      %s515 = smul.addr %s512, 8
      %s516 = sadd.s32 %s514, %s515
      %s517 = smul.addr %s516, 8
      %s518 = scalar_lea.vmem %s5, %s517
      // Predicated region
      $region41: #{frescat_area_forward.3} parent=39 // pred_check
        %p519 = pneg %p167
      $region42: #{frescat_area_forward.3} parent=39 // pred_check_branch
        %521 = sbr.rel (%p519) target = $region44
      $region43: #{frescat_area_forward.3} parent=39 // pred_region
        %s522 = smul.u32 2, %s21
      $region44: #{frescat_area_forward.3} parent=39 // pred_fallthru
        _
    $region40: #{frescat_area_forward.3} parent=5 // pred_fallthru
      _
    %p523 = scmp.le.s32.totalorder 2, %s11
    // Predicated region
    $region45: #{frescat_area_forward.3} parent=5 // pred_check
      %p524 = pneg %p523
    $region46: #{frescat_area_forward.3} parent=5 // pred_check_branch
      %526 = sbr.rel (%p524) target = $region48
    $region47: #{frescat_area_forward.3} parent=5 // pred_region
      %s527 = ssub.s32 %s11, 2
      // Predicated region
      $region49: #{frescat_area_forward.3} parent=47 // pred_check
        %p528 = pneg %p173
      $region50: #{frescat_area_forward.3} parent=47 // pred_check_branch
        %530 = sbr.rel (%p528) target = $region52
      $region51: #{frescat_area_forward.3} parent=47 // pred_region
        %s531 = smul.u32 2, %s23
        %p532 = scmp.lt.s32.totalorder %s22, 1
        %s533 = scalar_select %p532, %s22, 1
        %p534 = scmp.lt.s32.totalorder %s531, 1
        %s535 = scalar_select %p534, %s531, 1
        %s536 = smul.addr %s533, 8
        %s537 = sadd.s32 %s535, %s536
        %s538 = smul.addr %s537, 8
        %s539 = scalar_lea.vmem %s5, %s538
      $region52: #{frescat_area_forward.3} parent=47 // pred_fallthru
        _
    $region48: #{frescat_area_forward.3} parent=5 // pred_fallthru
      _
  $region6: #{frescat_area_forward.3} parent=0 // loop_footer
    %s15 = sadd.s32 1, %s11
  $region7: #{frescat_area_forward.3} parent=0 // loop_footer_branch
    %10 = sbr.rel target = $region3
  $region8: #{frescat_area_forward.3} parent=0 // loop_exit
    _

</llo_original>
